<compile_context>
chip_gen: v7x
topology: tpu7x:2x2x1
jax: 0.10.0
libtpu: 0.0.40
codegen_flags: <defaults>
</compile_context>

<pallas_src>
import functools

import numpy as np
import jax
import jax.numpy as jnp
from jax.experimental import pallas as pl
from jax.experimental.pallas import tpu as pltpu


def _make_kernel(Ksm, Cin_pad, Cout, ss, Wp, Qp_pad, Nb, neg_slope, eps, inv_count):
    """Block kernel: per sample -> im2col -> one MXU matmul -> fused masked instance
    norm -> LeakyReLU -> lane-dense store."""
    if 0.0 <= neg_slope <= 1.0:
        act = lambda y: jnp.maximum(y, neg_slope * y)          # 2 VPU ops
    else:  # unusual slopes (>1): fall back to the exact select form
        act = lambda y: jnp.where(y > 0, y, neg_slope * y)

    def kernel(x_ref, w_ref, mask_ref, o_ref, pt_ref):
        # x_ref:    (Nb, Cin_pad, L)        zero-padded samples, spatial flattened (lane-dense)
        # w_ref:    (ss*Cout, R_pad)        transposed sub-pixel weight (phase-major rows)
        # mask_ref: (ss, 1, Qp_pad)         1.0 where the position survives the output crop
        # o_ref:    (Nb, ss, Cout, Qp_pad)  phase-major output, spatial on the lane axis
        # pt_ref:   (R_pad, Qp_pad)         VMEM scratch: transposed im2col patch matrix

        # Hoist the per-phase crop masks once per block (same for every sample).
        masks = [mask_ref[j] for j in range(ss)]               # each (1, Qp_pad)

        for i in range(Nb):                                    # static unroll over samples
            # --- im2col: Ksm*Ksm contiguous shifted windows of the flattened input.
            #     Destination rows start at multiples of Cin_pad (=8k) -> tile-aligned
            #     full vector stores; columns are a multiple of 128 -> unmasked vst.
            #     (Columns that wrap across image rows are garbage but are excluded by
            #      the norm mask and never read back by the wrapper crop.)
            for m in range(Ksm):
                for n in range(Ksm):
                    r0 = (m * Ksm + n) * Cin_pad
                    q0 = m * Wp + n
                    pt_ref[r0:r0 + Cin_pad, :] = x_ref[i, :, q0:q0 + Qp_pad]

            # --- single MXU matmul per sample, f32 accumulation.
            acc = jnp.dot(w_ref[...], pt_ref[...], preferred_element_type=jnp.float32)

            # --- InstanceNorm2d(affine=False): fused masked sum / sum-of-squares in one
            #     pass over acc.  Phase slab j occupies rows [j*Cout, (j+1)*Cout).
            s1 = jnp.zeros((Cout, 1), jnp.float32)
            s2 = jnp.zeros((Cout, 1), jnp.float32)
            for j in range(ss):
                xm = acc[j * Cout:(j + 1) * Cout, :] * masks[j]
                s1 = s1 + jnp.sum(xm, axis=1, keepdims=True)
                s2 = s2 + jnp.sum(xm * xm, axis=1, keepdims=True)
            mean = s1 * inv_count
            var = jnp.maximum(s2 * inv_count - mean * mean, 0.0)
            inv_std = jax.lax.rsqrt(var + eps)
            scale = inv_std                                     # (Cout, 1)
            shift = -mean * inv_std                             # (Cout, 1)

            # --- normalize + LeakyReLU, lane-dense store of each phase slab.
            for j in range(ss):
                y = acc[j * Cout:(j + 1) * Cout, :] * scale + shift
                o_ref[i, j] = act(y).astype(o_ref.dtype)

    return kernel


def cnn_trans2d_layer(x, weight, bias=None, *, stride, padding, k_relu=0.2, eps=1e-5,
                      samples_per_block=None, compute_dtype=jnp.float32):
    """Forward pass of CNNTrans2dLayer (ConvTranspose2d -> InstanceNorm2d -> Leaky/ReLU).

    x:      (N, Cin, H, W)      NCHW, as in PyTorch
    weight: (Cin, Cout, K, K)   PyTorch ConvTranspose2d weight layout
    bias:   (Cout,) or None     accepted for interface parity; cancels exactly under
                                InstanceNorm2d(affine=False) and is dropped.
    compute_dtype:              dtype of the matmul operands (f32 default; bf16 is the
                                v6e/v7x production-size lever — accumulation stays f32).
    returns (N, Cout, Ho, Wo)   NCHW
    """
    N, Cin, H, W = x.shape
    Cin_w, Cout, K, K2 = weight.shape
    assert Cin_w == Cin and K2 == K
    s, p = int(stride), int(padding)
    Ho = (H - 1) * s - 2 * p + K
    Wo = (W - 1) * s - 2 * p + K
    assert Ho > 0 and Wo > 0, "invalid ConvTranspose2d geometry"
    neg_slope = float(k_relu) if k_relu >= 0 else 0.0   # module uses plain ReLU if k_relu < 0
    del bias                                            # exact no-op before InstanceNorm2d

    ss = s * s                          # number of sub-pixel phases
    Ksm = -(-K // s)                    # sub-kernel size per phase (ceil(K / s))
    Kp = Ksm * s                        # kernel extent padded up to a multiple of s

    pad_sp = Ksm - 1                    # spatial zero padding of the input
    Hp, Wp = H + 2 * pad_sp, W + 2 * pad_sp
    Hf = H + Ksm - 1                    # per-phase output rows
    Qp = Hf * Wp                        # per-phase valid columns (incl. masked wrap cols)
    Qp_pad = -(-Qp // 128) * 128        # lane-pad to a multiple of 128 (unmasked vld/vst)
    Cin_pad = -(-Cin // 8) * 8          # sublane-align the im2col row blocks
    R_pad = Ksm * Ksm * Cin_pad         # im2col contraction length (tile-aligned)
    q0_max = (Ksm - 1) * Wp + (Ksm - 1)
    L = q0_max + Qp_pad                 # flattened length so every shifted window is in-bounds

    # ---- sample blocking: fat grid steps amortize the ~0.35us per-step fixed cost ------
    if samples_per_block is None:
        if N <= 2:
            Nb = N                      # whole (tiny) batch in one step
        elif N <= 16:
            Nb = -(-N // 2)             # two steps -> one fat step per v7x TensorCore
        else:
            Nb = 8
    else:
        Nb = int(samples_per_block)
    Ng = -(-N // Nb)
    N_pad = Ng * Nb

    # ---- glue: zero-pad batch/channels/spatial, flatten spatial last (lane-dense) ------
    xf = x.astype(jnp.float32)
    xp = jnp.pad(xf, ((0, N_pad - N), (0, Cin_pad - Cin),
                      (pad_sp, pad_sp), (pad_sp, pad_sp)))
    x_flat = xp.reshape(N_pad, Cin_pad, Hp * Wp)
    x_flat = jnp.pad(x_flat, ((0, 0), (0, 0), (0, L - Hp * Wp))).astype(compute_dtype)

    # ---- glue: sub-pixel weight, transposed for (weight @ patches^T) --------------------
    # Weff_T[(ry*s+rx)*Cout + co, (m*Ksm+n)*Cin_pad + ci]
    #   = w[ci, co, ry + s*(Ksm-1-m), rx + s*(Ksm-1-n)]   (zero-padded extra taps/channels)
    wf = weight.astype(jnp.float32)
    w_pad = jnp.pad(wf, ((0, Cin_pad - Cin), (0, 0), (0, Kp - K), (0, Kp - K)))
    w_r = w_pad.reshape(Cin_pad, Cout, Ksm, s, Ksm, s)     # ky = m*s + ry
    w_r = w_r[:, :, ::-1, :, ::-1, :]                      # flip taps -> correlation
    w_eff_t = jnp.transpose(w_r, (3, 5, 1, 2, 4, 0)).reshape(ss * Cout, R_pad)
    w_eff_t = w_eff_t.astype(compute_dtype)

    # ---- glue: crop-validity mask (static, per phase; zero over padded lanes) -----------
    phase = np.arange(ss)
    ry, rx = phase // s, phase % s
    q = np.arange(Qp_pad)
    ay, ax = q // Wp, q % Wp
    oy = s * ay[None, :] + ry[:, None] - p
    ox = s * ax[None, :] + rx[:, None] - p
    valid = (oy >= 0) & (oy < Ho) & (ox >= 0) & (ox < Wo) & (q[None, :] < Qp)
    mask = jnp.asarray(valid.astype(np.float32).reshape(ss, 1, Qp_pad))

    kernel = _make_kernel(Ksm, Cin_pad, Cout, ss, Wp, Qp_pad, Nb, neg_slope, float(eps),
                          1.0 / float(Ho * Wo))

    out_k = pl.pallas_call(
        kernel,
        out_shape=jax.ShapeDtypeStruct((N_pad, ss, Cout, Qp_pad), jnp.float32),
        grid=(Ng,),
        in_specs=[
            pl.BlockSpec((Nb, Cin_pad, L), lambda b: (b, 0, 0)),
            pl.BlockSpec((ss * Cout, R_pad), lambda b: (0, 0)),   # resident across grid
            pl.BlockSpec((ss, 1, Qp_pad), lambda b: (0, 0, 0)),   # resident across grid
        ],
        out_specs=pl.BlockSpec((Nb, ss, Cout, Qp_pad), lambda b: (b, 0, 0, 0)),
        scratch_shapes=[pltpu.VMEM((R_pad, Qp_pad), compute_dtype)],
        compiler_params=pltpu.CompilerParams(dimension_semantics=("parallel",)),
    )(x_flat, w_eff_t, mask)

    # ---- glue: depth-to-space interleave of the ss phases + output-padding crop ---------
    y = out_k[:N, :, :, :Qp].reshape(N, s, s, Cout, Hf, Wp)
    y = jnp.transpose(y, (0, 3, 4, 1, 5, 2)).reshape(N, Cout, s * Hf, s * Wp)
    return y[:, :, p:p + Ho, p:p + Wo]


# ---------------- independent pure-JAX reference (scatter form, with bias) ----------------
def _ref_forward(x, weight, bias, stride, padding, k_relu=0.2, eps=1e-5):
    N, Cin, H, W = x.shape
    _, Cout, K, _ = weight.shape
    Ho = (H - 1) * stride - 2 * padding + K
    Wo = (W - 1) * stride - 2 * padding + K
    full = jnp.zeros((N, Cout, (H - 1) * stride + K, (W - 1) * stride + K), jnp.float32)
    for ky in range(K):
        for kx in range(K):
            contrib = jnp.einsum('nihw,io->nohw', x, weight[:, :, ky, kx])
            full = full.at[
                :, :,
                ky:ky + (H - 1) * stride + 1:stride,
                kx:kx + (W - 1) * stride + 1:stride,
            ].add(contrib)
    out = full[:, :, padding:padding + Ho, padding:padding + Wo]
    out = out + bias[None, :, None, None]
    mean = jnp.mean(out, axis=(2, 3), keepdims=True)
    var = jnp.mean((out - mean) ** 2, axis=(2, 3), keepdims=True)
    y = (out - mean) * jax.lax.rsqrt(var + eps)
    slope = k_relu if k_relu >= 0 else 0.0
    return jnp.where(y > 0, y, slope * y)


if __name__ == "__main__":
    # Small shapes consistent with the module: in_ch=4, out_ch=8, k=4, stride=2, pad=1.
    N, Cin, H, W = 2, 4, 16, 16
    Cout, K, stride, padding = 8, 4, 2, 1

    key = jax.random.PRNGKey(0)
    kx, kw, kb = jax.random.split(key, 3)
    x = jax.random.normal(kx, (N, Cin, H, W), jnp.float32)
    # ConvTranspose2d weight layout: (Cin, Cout, K, K); nonzero bias to show it cancels.
    weight = jax.random.normal(kw, (Cin, Cout, K, K), jnp.float32) * 0.1
    bias = jax.random.normal(kb, (Cout,), jnp.float32) * 0.1

    fwd = jax.jit(functools.partial(cnn_trans2d_layer, stride=stride,
                                    padding=padding, k_relu=0.2))
    out = jax.block_until_ready(fwd(x, weight, bias))

    ref = _ref_forward(x, weight, bias, stride, padding, k_relu=0.2)
    Ho = (H - 1) * stride - 2 * padding + K
    Wo = (W - 1) * stride - 2 * padding + K
    assert out.shape == (N, Cout, Ho, Wo)
    max_err = float(jnp.max(jnp.abs(out - ref)))
    assert jnp.allclose(out, ref, atol=2e-4, rtol=2e-4), max_err

    print("KERNEL_OK")
</pallas_src>

<mosaic_0001>
module attributes {stable_mosaic.version = 11 : i64} {
  func.func @kernel(%arg0: i32, %arg1: memref<2x8x403xf32, #tpu.memory_space<vmem>>, %arg2: memref<32x32xf32, #tpu.memory_space<vmem>>, %arg3: memref<4x1x384xf32, #tpu.memory_space<vmem>>, %arg4: memref<2x4x8x384xf32, #tpu.memory_space<vmem>>, %arg5: memref<32x384xf32, #tpu.memory_space<vmem>>) attributes {dimension_semantics = [#tpu.dimension_semantics<parallel>], iteration_bounds = array<i64: 1>, scalar_prefetch = 0 : i64, scratch_operands = 1 : i64, tpu.core_type = #tpu.core_type<tc>, window_params = [{transform_indices = @transform_0, window_bounds = array<i64: 2, 8, 403>}, {pipeline_mode = #tpu.pipeline_mode<synchronous>, transform_indices = @transform_1, window_bounds = array<i64: 32, 32>}, {pipeline_mode = #tpu.pipeline_mode<synchronous>, transform_indices = @transform_2, window_bounds = array<i64: 4, 1, 384>}, {transform_indices = @transform_3, window_bounds = array<i64: 2, 4, 8, 384>}]} {
    %c0 = arith.constant 0 : index
    %c0_0 = arith.constant 0 : index
    %c0_1 = arith.constant 0 : index
    %0 = vector.load %arg3[%c0, %c0_0, %c0_1] : memref<4x1x384xf32, #tpu.memory_space<vmem>>, vector<1x1x384xf32>
    %1 = vector.shape_cast %0 : vector<1x1x384xf32> to vector<1x384xf32>
    %c1 = arith.constant 1 : index
    %c0_2 = arith.constant 0 : index
    %c0_3 = arith.constant 0 : index
    %2 = vector.load %arg3[%c1, %c0_2, %c0_3] : memref<4x1x384xf32, #tpu.memory_space<vmem>>, vector<1x1x384xf32>
    %3 = vector.shape_cast %2 : vector<1x1x384xf32> to vector<1x384xf32>
    %c2 = arith.constant 2 : index
    %c0_4 = arith.constant 0 : index
    %c0_5 = arith.constant 0 : index
    %4 = vector.load %arg3[%c2, %c0_4, %c0_5] : memref<4x1x384xf32, #tpu.memory_space<vmem>>, vector<1x1x384xf32>
    %5 = vector.shape_cast %4 : vector<1x1x384xf32> to vector<1x384xf32>
    %c3 = arith.constant 3 : index
    %c0_6 = arith.constant 0 : index
    %c0_7 = arith.constant 0 : index
    %6 = vector.load %arg3[%c3, %c0_6, %c0_7] : memref<4x1x384xf32, #tpu.memory_space<vmem>>, vector<1x1x384xf32>
    %7 = vector.shape_cast %6 : vector<1x1x384xf32> to vector<1x384xf32>
    %c0_8 = arith.constant 0 : index
    %c0_9 = arith.constant 0 : index
    %c0_10 = arith.constant 0 : index
    %8 = vector.load %arg1[%c0_8, %c0_9, %c0_10] : memref<2x8x403xf32, #tpu.memory_space<vmem>>, vector<1x8x384xf32>
    %9 = vector.shape_cast %8 : vector<1x8x384xf32> to vector<8x384xf32>
    %c0_11 = arith.constant 0 : index
    %c0_12 = arith.constant 0 : index
    %10 = vector.load %arg5[%c0_11, %c0_12] : memref<32x384xf32, #tpu.memory_space<vmem>>, vector<8x384xf32>
    tpu.vector_store %arg5[%c0_11, %c0_12], %9 {strides = array<i32>} : memref<32x384xf32, #tpu.memory_space<vmem>>, vector<8x384xf32>,
    %c0_13 = arith.constant 0 : index
    %c0_14 = arith.constant 0 : index
    %c1_15 = arith.constant 1 : index
    %11 = vector.load %arg1[%c0_13, %c0_14, %c1_15] : memref<2x8x403xf32, #tpu.memory_space<vmem>>, vector<1x8x384xf32>
    %12 = vector.shape_cast %11 : vector<1x8x384xf32> to vector<8x384xf32>
    %c8 = arith.constant 8 : index
    %c0_16 = arith.constant 0 : index
    %13 = vector.load %arg5[%c8, %c0_16] : memref<32x384xf32, #tpu.memory_space<vmem>>, vector<8x384xf32>
    tpu.vector_store %arg5[%c8, %c0_16], %12 {strides = array<i32>} : memref<32x384xf32, #tpu.memory_space<vmem>>, vector<8x384xf32>,
    %c0_17 = arith.constant 0 : index
    %c0_18 = arith.constant 0 : index
    %c18 = arith.constant 18 : index
    %14 = vector.load %arg1[%c0_17, %c0_18, %c18] : memref<2x8x403xf32, #tpu.memory_space<vmem>>, vector<1x8x384xf32>
    %15 = vector.shape_cast %14 : vector<1x8x384xf32> to vector<8x384xf32>
    %c16 = arith.constant 16 : index
    %c0_19 = arith.constant 0 : index
    %16 = vector.load %arg5[%c16, %c0_19] : memref<32x384xf32, #tpu.memory_space<vmem>>, vector<8x384xf32>
    tpu.vector_store %arg5[%c16, %c0_19], %15 {strides = array<i32>} : memref<32x384xf32, #tpu.memory_space<vmem>>, vector<8x384xf32>,
    %c0_20 = arith.constant 0 : index
    %c0_21 = arith.constant 0 : index
    %c19 = arith.constant 19 : index
    %17 = vector.load %arg1[%c0_20, %c0_21, %c19] : memref<2x8x403xf32, #tpu.memory_space<vmem>>, vector<1x8x384xf32>
    %18 = vector.shape_cast %17 : vector<1x8x384xf32> to vector<8x384xf32>
    %c24 = arith.constant 24 : index
    %c0_22 = arith.constant 0 : index
    %19 = vector.load %arg5[%c24, %c0_22] : memref<32x384xf32, #tpu.memory_space<vmem>>, vector<8x384xf32>
    tpu.vector_store %arg5[%c24, %c0_22], %18 {strides = array<i32>} : memref<32x384xf32, #tpu.memory_space<vmem>>, vector<8x384xf32>,
    %c0_23 = arith.constant 0 : index
    %c0_24 = arith.constant 0 : index
    %20 = vector.load %arg2[%c0_23, %c0_24] : memref<32x32xf32, #tpu.memory_space<vmem>>, vector<32x32xf32>
    %c0_25 = arith.constant 0 : index
    %c0_26 = arith.constant 0 : index
    %21 = vector.load %arg5[%c0_25, %c0_26] : memref<32x384xf32, #tpu.memory_space<vmem>>, vector<32x384xf32>
    %cst = arith.constant dense<0.000000e+00> : vector<32x384xf32>
    %22 = tpu.matmul %20, %21, %cst {dimension_numbers = #tpu.dot_dimension_numbers<[1], [0], [0], [1], [0, 0, 1, 1], [], []>} : vector<32x32xf32>, vector<32x384xf32>, vector<32x384xf32> -> vector<32x384xf32>
    %cst_27 = arith.constant 0.000000e+00 : f32
    %23 = vector.broadcast %cst_27 : f32 to vector<8x1xf32>
    %cst_28 = arith.constant 0.000000e+00 : f32
    %24 = vector.broadcast %cst_28 : f32 to vector<8x1xf32>
    %25 = vector.extract_strided_slice %22 {offsets = [0, 0], sizes = [8, 384], strides = [1, 1]} : vector<32x384xf32> to vector<8x384xf32>
    %26 = vector.broadcast %1 : vector<1x384xf32> to vector<8x384xf32>
    %27 = arith.mulf %25, %26 : vector<8x384xf32>
    %cst_29 = arith.constant dense<0.000000e+00> : vector<8xf32>
    %28 = vector.multi_reduction <add>, %27, %cst_29 [1] : vector<8x384xf32> to vector<8xf32>
    %29 = vector.shape_cast %28 : vector<8xf32> to vector<8x1xf32>
    %30 = arith.addf %23, %29 : vector<8x1xf32>
    %31 = arith.mulf %27, %27 : vector<8x384xf32>
    %cst_30 = arith.constant dense<0.000000e+00> : vector<8xf32>
    %32 = vector.multi_reduction <add>, %31, %cst_30 [1] : vector<8x384xf32> to vector<8xf32>
    %33 = vector.shape_cast %32 : vector<8xf32> to vector<8x1xf32>
    %34 = arith.addf %24, %33 : vector<8x1xf32>
    %35 = vector.extract_strided_slice %22 {offsets = [8, 0], sizes = [8, 384], strides = [1, 1]} : vector<32x384xf32> to vector<8x384xf32>
    %36 = vector.broadcast %3 : vector<1x384xf32> to vector<8x384xf32>
    %37 = arith.mulf %35, %36 : vector<8x384xf32>
    %cst_31 = arith.constant dense<0.000000e+00> : vector<8xf32>
    %38 = vector.multi_reduction <add>, %37, %cst_31 [1] : vector<8x384xf32> to vector<8xf32>
    %39 = vector.shape_cast %38 : vector<8xf32> to vector<8x1xf32>
    %40 = arith.addf %30, %39 : vector<8x1xf32>
    %41 = arith.mulf %37, %37 : vector<8x384xf32>
    %cst_32 = arith.constant dense<0.000000e+00> : vector<8xf32>
    %42 = vector.multi_reduction <add>, %41, %cst_32 [1] : vector<8x384xf32> to vector<8xf32>
    %43 = vector.shape_cast %42 : vector<8xf32> to vector<8x1xf32>
    %44 = arith.addf %34, %43 : vector<8x1xf32>
    %45 = vector.extract_strided_slice %22 {offsets = [16, 0], sizes = [8, 384], strides = [1, 1]} : vector<32x384xf32> to vector<8x384xf32>
    %46 = vector.broadcast %5 : vector<1x384xf32> to vector<8x384xf32>
    %47 = arith.mulf %45, %46 : vector<8x384xf32>
    %cst_33 = arith.constant dense<0.000000e+00> : vector<8xf32>
    %48 = vector.multi_reduction <add>, %47, %cst_33 [1] : vector<8x384xf32> to vector<8xf32>
    %49 = vector.shape_cast %48 : vector<8xf32> to vector<8x1xf32>
    %50 = arith.addf %40, %49 : vector<8x1xf32>
    %51 = arith.mulf %47, %47 : vector<8x384xf32>
    %cst_34 = arith.constant dense<0.000000e+00> : vector<8xf32>
    %52 = vector.multi_reduction <add>, %51, %cst_34 [1] : vector<8x384xf32> to vector<8xf32>
    %53 = vector.shape_cast %52 : vector<8xf32> to vector<8x1xf32>
    %54 = arith.addf %44, %53 : vector<8x1xf32>
    %55 = vector.extract_strided_slice %22 {offsets = [24, 0], sizes = [8, 384], strides = [1, 1]} : vector<32x384xf32> to vector<8x384xf32>
    %56 = vector.broadcast %7 : vector<1x384xf32> to vector<8x384xf32>
    %57 = arith.mulf %55, %56 : vector<8x384xf32>
    %cst_35 = arith.constant dense<0.000000e+00> : vector<8xf32>
    %58 = vector.multi_reduction <add>, %57, %cst_35 [1] : vector<8x384xf32> to vector<8xf32>
    %59 = vector.shape_cast %58 : vector<8xf32> to vector<8x1xf32>
    %60 = arith.addf %50, %59 : vector<8x1xf32>
    %61 = arith.mulf %57, %57 : vector<8x384xf32>
    %cst_36 = arith.constant dense<0.000000e+00> : vector<8xf32>
    %62 = vector.multi_reduction <add>, %61, %cst_36 [1] : vector<8x384xf32> to vector<8xf32>
    %63 = vector.shape_cast %62 : vector<8xf32> to vector<8x1xf32>
    %64 = arith.addf %54, %63 : vector<8x1xf32>
    %cst_37 = arith.constant 9.765625E-4 : f32
    %65 = vector.broadcast %cst_37 : f32 to vector<8x1xf32>
    %66 = arith.mulf %60, %65 : vector<8x1xf32>
    %cst_38 = arith.constant 9.765625E-4 : f32
    %67 = vector.broadcast %cst_38 : f32 to vector<8x1xf32>
    %68 = arith.mulf %64, %67 : vector<8x1xf32>
    %69 = arith.mulf %66, %66 : vector<8x1xf32>
    %70 = arith.subf %68, %69 : vector<8x1xf32>
    %cst_39 = arith.constant 0.000000e+00 : f32
    %71 = vector.broadcast %cst_39 : f32 to vector<8x1xf32>
    %72 = arith.maximumf %70, %71 : vector<8x1xf32>
    %cst_40 = arith.constant 9.99999974E-6 : f32
    %73 = vector.broadcast %cst_40 : f32 to vector<8x1xf32>
    %74 = arith.addf %72, %73 : vector<8x1xf32>
    %75 = math.rsqrt %74 : vector<8x1xf32>
    %cst_41 = arith.constant 0.000000e+00 : f32
    %76 = vector.broadcast %cst_41 : f32 to vector<8x1xf32>
    %77 = arith.subf %76, %66 : vector<8x1xf32>
    %78 = arith.mulf %77, %75 : vector<8x1xf32>
    %79 = vector.extract_strided_slice %22 {offsets = [0, 0], sizes = [8, 384], strides = [1, 1]} : vector<32x384xf32> to vector<8x384xf32>
    %80 = vector.broadcast %75 : vector<8x1xf32> to vector<8x384xf32>
    %81 = arith.mulf %79, %80 : vector<8x384xf32>
    %82 = vector.broadcast %78 : vector<8x1xf32> to vector<8x384xf32>
    %83 = arith.addf %81, %82 : vector<8x384xf32>
    %cst_42 = arith.constant 2.000000e-01 : f32
    %84 = vector.broadcast %cst_42 : f32 to vector<8x384xf32>
    %85 = arith.mulf %84, %83 : vector<8x384xf32>
    %86 = arith.maximumf %83, %85 : vector<8x384xf32>
    %c0_43 = arith.constant 0 : index
    %c0_44 = arith.constant 0 : index
    %c0_45 = arith.constant 0 : index
    %c0_46 = arith.constant 0 : index
    %87 = vector.load %arg4[%c0_43, %c0_44, %c0_45, %c0_46] : memref<2x4x8x384xf32, #tpu.memory_space<vmem>>, vector<1x1x8x384xf32>
    %88 = vector.shape_cast %87 : vector<1x1x8x384xf32> to vector<8x384xf32>
    %89 = vector.shape_cast %86 : vector<8x384xf32> to vector<1x1x8x384xf32>
    tpu.vector_store %arg4[%c0_43, %c0_44, %c0_45, %c0_46], %89 {strides = array<i32>} : memref<2x4x8x384xf32, #tpu.memory_space<vmem>>, vector<1x1x8x384xf32>,
    %90 = vector.extract_strided_slice %22 {offsets = [8, 0], sizes = [8, 384], strides = [1, 1]} : vector<32x384xf32> to vector<8x384xf32>
    %91 = vector.broadcast %75 : vector<8x1xf32> to vector<8x384xf32>
    %92 = arith.mulf %90, %91 : vector<8x384xf32>
    %93 = vector.broadcast %78 : vector<8x1xf32> to vector<8x384xf32>
    %94 = arith.addf %92, %93 : vector<8x384xf32>
    %cst_47 = arith.constant 2.000000e-01 : f32
    %95 = vector.broadcast %cst_47 : f32 to vector<8x384xf32>
    %96 = arith.mulf %95, %94 : vector<8x384xf32>
    %97 = arith.maximumf %94, %96 : vector<8x384xf32>
    %c0_48 = arith.constant 0 : index
    %c1_49 = arith.constant 1 : index
    %c0_50 = arith.constant 0 : index
    %c0_51 = arith.constant 0 : index
    %98 = vector.load %arg4[%c0_48, %c1_49, %c0_50, %c0_51] : memref<2x4x8x384xf32, #tpu.memory_space<vmem>>, vector<1x1x8x384xf32>
    %99 = vector.shape_cast %98 : vector<1x1x8x384xf32> to vector<8x384xf32>
    %100 = vector.shape_cast %97 : vector<8x384xf32> to vector<1x1x8x384xf32>
    tpu.vector_store %arg4[%c0_48, %c1_49, %c0_50, %c0_51], %100 {strides = array<i32>} : memref<2x4x8x384xf32, #tpu.memory_space<vmem>>, vector<1x1x8x384xf32>,
    %101 = vector.extract_strided_slice %22 {offsets = [16, 0], sizes = [8, 384], strides = [1, 1]} : vector<32x384xf32> to vector<8x384xf32>
    %102 = vector.broadcast %75 : vector<8x1xf32> to vector<8x384xf32>
    %103 = arith.mulf %101, %102 : vector<8x384xf32>
    %104 = vector.broadcast %78 : vector<8x1xf32> to vector<8x384xf32>
    %105 = arith.addf %103, %104 : vector<8x384xf32>
    %cst_52 = arith.constant 2.000000e-01 : f32
    %106 = vector.broadcast %cst_52 : f32 to vector<8x384xf32>
    %107 = arith.mulf %106, %105 : vector<8x384xf32>
    %108 = arith.maximumf %105, %107 : vector<8x384xf32>
    %c0_53 = arith.constant 0 : index
    %c2_54 = arith.constant 2 : index
    %c0_55 = arith.constant 0 : index
    %c0_56 = arith.constant 0 : index
    %109 = vector.load %arg4[%c0_53, %c2_54, %c0_55, %c0_56] : memref<2x4x8x384xf32, #tpu.memory_space<vmem>>, vector<1x1x8x384xf32>
    %110 = vector.shape_cast %109 : vector<1x1x8x384xf32> to vector<8x384xf32>
    %111 = vector.shape_cast %108 : vector<8x384xf32> to vector<1x1x8x384xf32>
    tpu.vector_store %arg4[%c0_53, %c2_54, %c0_55, %c0_56], %111 {strides = array<i32>} : memref<2x4x8x384xf32, #tpu.memory_space<vmem>>, vector<1x1x8x384xf32>,
    %112 = vector.extract_strided_slice %22 {offsets = [24, 0], sizes = [8, 384], strides = [1, 1]} : vector<32x384xf32> to vector<8x384xf32>
    %113 = vector.broadcast %75 : vector<8x1xf32> to vector<8x384xf32>
    %114 = arith.mulf %112, %113 : vector<8x384xf32>
    %115 = vector.broadcast %78 : vector<8x1xf32> to vector<8x384xf32>
    %116 = arith.addf %114, %115 : vector<8x384xf32>
    %cst_57 = arith.constant 2.000000e-01 : f32
    %117 = vector.broadcast %cst_57 : f32 to vector<8x384xf32>
    %118 = arith.mulf %117, %116 : vector<8x384xf32>
    %119 = arith.maximumf %116, %118 : vector<8x384xf32>
    %c0_58 = arith.constant 0 : index
    %c3_59 = arith.constant 3 : index
    %c0_60 = arith.constant 0 : index
    %c0_61 = arith.constant 0 : index
    %120 = vector.load %arg4[%c0_58, %c3_59, %c0_60, %c0_61] : memref<2x4x8x384xf32, #tpu.memory_space<vmem>>, vector<1x1x8x384xf32>
    %121 = vector.shape_cast %120 : vector<1x1x8x384xf32> to vector<8x384xf32>
    %122 = vector.shape_cast %119 : vector<8x384xf32> to vector<1x1x8x384xf32>
    tpu.vector_store %arg4[%c0_58, %c3_59, %c0_60, %c0_61], %122 {strides = array<i32>} : memref<2x4x8x384xf32, #tpu.memory_space<vmem>>, vector<1x1x8x384xf32>,
    %c1_62 = arith.constant 1 : index
    %c0_63 = arith.constant 0 : index
    %c0_64 = arith.constant 0 : index
    %123 = vector.load %arg1[%c1_62, %c0_63, %c0_64] : memref<2x8x403xf32, #tpu.memory_space<vmem>>, vector<1x8x384xf32>
    %124 = vector.shape_cast %123 : vector<1x8x384xf32> to vector<8x384xf32>
    %c0_65 = arith.constant 0 : index
    %c0_66 = arith.constant 0 : index
    %125 = vector.load %arg5[%c0_65, %c0_66] : memref<32x384xf32, #tpu.memory_space<vmem>>, vector<8x384xf32>
    tpu.vector_store %arg5[%c0_65, %c0_66], %124 {strides = array<i32>} : memref<32x384xf32, #tpu.memory_space<vmem>>, vector<8x384xf32>,
    %c1_67 = arith.constant 1 : index
    %c0_68 = arith.constant 0 : index
    %c1_69 = arith.constant 1 : index
    %126 = vector.load %arg1[%c1_67, %c0_68, %c1_69] : memref<2x8x403xf32, #tpu.memory_space<vmem>>, vector<1x8x384xf32>
    %127 = vector.shape_cast %126 : vector<1x8x384xf32> to vector<8x384xf32>
    %c8_70 = arith.constant 8 : index
    %c0_71 = arith.constant 0 : index
    %128 = vector.load %arg5[%c8_70, %c0_71] : memref<32x384xf32, #tpu.memory_space<vmem>>, vector<8x384xf32>
    tpu.vector_store %arg5[%c8_70, %c0_71], %127 {strides = array<i32>} : memref<32x384xf32, #tpu.memory_space<vmem>>, vector<8x384xf32>,
    %c1_72 = arith.constant 1 : index
    %c0_73 = arith.constant 0 : index
    %c18_74 = arith.constant 18 : index
    %129 = vector.load %arg1[%c1_72, %c0_73, %c18_74] : memref<2x8x403xf32, #tpu.memory_space<vmem>>, vector<1x8x384xf32>
    %130 = vector.shape_cast %129 : vector<1x8x384xf32> to vector<8x384xf32>
    %c16_75 = arith.constant 16 : index
    %c0_76 = arith.constant 0 : index
    %131 = vector.load %arg5[%c16_75, %c0_76] : memref<32x384xf32, #tpu.memory_space<vmem>>, vector<8x384xf32>
    tpu.vector_store %arg5[%c16_75, %c0_76], %130 {strides = array<i32>} : memref<32x384xf32, #tpu.memory_space<vmem>>, vector<8x384xf32>,
    %c1_77 = arith.constant 1 : index
    %c0_78 = arith.constant 0 : index
    %c19_79 = arith.constant 19 : index
    %132 = vector.load %arg1[%c1_77, %c0_78, %c19_79] : memref<2x8x403xf32, #tpu.memory_space<vmem>>, vector<1x8x384xf32>
    %133 = vector.shape_cast %132 : vector<1x8x384xf32> to vector<8x384xf32>
    %c24_80 = arith.constant 24 : index
    %c0_81 = arith.constant 0 : index
    %134 = vector.load %arg5[%c24_80, %c0_81] : memref<32x384xf32, #tpu.memory_space<vmem>>, vector<8x384xf32>
    tpu.vector_store %arg5[%c24_80, %c0_81], %133 {strides = array<i32>} : memref<32x384xf32, #tpu.memory_space<vmem>>, vector<8x384xf32>,
    %c0_82 = arith.constant 0 : index
    %c0_83 = arith.constant 0 : index
    %135 = vector.load %arg2[%c0_82, %c0_83] : memref<32x32xf32, #tpu.memory_space<vmem>>, vector<32x32xf32>
    %c0_84 = arith.constant 0 : index
    %c0_85 = arith.constant 0 : index
    %136 = vector.load %arg5[%c0_84, %c0_85] : memref<32x384xf32, #tpu.memory_space<vmem>>, vector<32x384xf32>
    %cst_86 = arith.constant dense<0.000000e+00> : vector<32x384xf32>
    %137 = tpu.matmul %135, %136, %cst_86 {dimension_numbers = #tpu.dot_dimension_numbers<[1], [0], [0], [1], [0, 0, 1, 1], [], []>} : vector<32x32xf32>, vector<32x384xf32>, vector<32x384xf32> -> vector<32x384xf32>
    %cst_87 = arith.constant 0.000000e+00 : f32
    %138 = vector.broadcast %cst_87 : f32 to vector<8x1xf32>
    %cst_88 = arith.constant 0.000000e+00 : f32
    %139 = vector.broadcast %cst_88 : f32 to vector<8x1xf32>
    %140 = vector.extract_strided_slice %137 {offsets = [0, 0], sizes = [8, 384], strides = [1, 1]} : vector<32x384xf32> to vector<8x384xf32>
    %141 = vector.broadcast %1 : vector<1x384xf32> to vector<8x384xf32>
    %142 = arith.mulf %140, %141 : vector<8x384xf32>
    %cst_89 = arith.constant dense<0.000000e+00> : vector<8xf32>
    %143 = vector.multi_reduction <add>, %142, %cst_89 [1] : vector<8x384xf32> to vector<8xf32>
    %144 = vector.shape_cast %143 : vector<8xf32> to vector<8x1xf32>
    %145 = arith.addf %138, %144 : vector<8x1xf32>
    %146 = arith.mulf %142, %142 : vector<8x384xf32>
    %cst_90 = arith.constant dense<0.000000e+00> : vector<8xf32>
    %147 = vector.multi_reduction <add>, %146, %cst_90 [1] : vector<8x384xf32> to vector<8xf32>
    %148 = vector.shape_cast %147 : vector<8xf32> to vector<8x1xf32>
    %149 = arith.addf %139, %148 : vector<8x1xf32>
    %150 = vector.extract_strided_slice %137 {offsets = [8, 0], sizes = [8, 384], strides = [1, 1]} : vector<32x384xf32> to vector<8x384xf32>
    %151 = vector.broadcast %3 : vector<1x384xf32> to vector<8x384xf32>
    %152 = arith.mulf %150, %151 : vector<8x384xf32>
    %cst_91 = arith.constant dense<0.000000e+00> : vector<8xf32>
    %153 = vector.multi_reduction <add>, %152, %cst_91 [1] : vector<8x384xf32> to vector<8xf32>
    %154 = vector.shape_cast %153 : vector<8xf32> to vector<8x1xf32>
    %155 = arith.addf %145, %154 : vector<8x1xf32>
    %156 = arith.mulf %152, %152 : vector<8x384xf32>
    %cst_92 = arith.constant dense<0.000000e+00> : vector<8xf32>
    %157 = vector.multi_reduction <add>, %156, %cst_92 [1] : vector<8x384xf32> to vector<8xf32>
    %158 = vector.shape_cast %157 : vector<8xf32> to vector<8x1xf32>
    %159 = arith.addf %149, %158 : vector<8x1xf32>
    %160 = vector.extract_strided_slice %137 {offsets = [16, 0], sizes = [8, 384], strides = [1, 1]} : vector<32x384xf32> to vector<8x384xf32>
    %161 = vector.broadcast %5 : vector<1x384xf32> to vector<8x384xf32>
    %162 = arith.mulf %160, %161 : vector<8x384xf32>
    %cst_93 = arith.constant dense<0.000000e+00> : vector<8xf32>
    %163 = vector.multi_reduction <add>, %162, %cst_93 [1] : vector<8x384xf32> to vector<8xf32>
    %164 = vector.shape_cast %163 : vector<8xf32> to vector<8x1xf32>
    %165 = arith.addf %155, %164 : vector<8x1xf32>
    %166 = arith.mulf %162, %162 : vector<8x384xf32>
    %cst_94 = arith.constant dense<0.000000e+00> : vector<8xf32>
    %167 = vector.multi_reduction <add>, %166, %cst_94 [1] : vector<8x384xf32> to vector<8xf32>
    %168 = vector.shape_cast %167 : vector<8xf32> to vector<8x1xf32>
    %169 = arith.addf %159, %168 : vector<8x1xf32>
    %170 = vector.extract_strided_slice %137 {offsets = [24, 0], sizes = [8, 384], strides = [1, 1]} : vector<32x384xf32> to vector<8x384xf32>
    %171 = vector.broadcast %7 : vector<1x384xf32> to vector<8x384xf32>
    %172 = arith.mulf %170, %171 : vector<8x384xf32>
    %cst_95 = arith.constant dense<0.000000e+00> : vector<8xf32>
    %173 = vector.multi_reduction <add>, %172, %cst_95 [1] : vector<8x384xf32> to vector<8xf32>
    %174 = vector.shape_cast %173 : vector<8xf32> to vector<8x1xf32>
    %175 = arith.addf %165, %174 : vector<8x1xf32>
    %176 = arith.mulf %172, %172 : vector<8x384xf32>
    %cst_96 = arith.constant dense<0.000000e+00> : vector<8xf32>
    %177 = vector.multi_reduction <add>, %176, %cst_96 [1] : vector<8x384xf32> to vector<8xf32>
    %178 = vector.shape_cast %177 : vector<8xf32> to vector<8x1xf32>
    %179 = arith.addf %169, %178 : vector<8x1xf32>
    %cst_97 = arith.constant 9.765625E-4 : f32
    %180 = vector.broadcast %cst_97 : f32 to vector<8x1xf32>
    %181 = arith.mulf %175, %180 : vector<8x1xf32>
    %cst_98 = arith.constant 9.765625E-4 : f32
    %182 = vector.broadcast %cst_98 : f32 to vector<8x1xf32>
    %183 = arith.mulf %179, %182 : vector<8x1xf32>
    %184 = arith.mulf %181, %181 : vector<8x1xf32>
    %185 = arith.subf %183, %184 : vector<8x1xf32>
    %cst_99 = arith.constant 0.000000e+00 : f32
    %186 = vector.broadcast %cst_99 : f32 to vector<8x1xf32>
    %187 = arith.maximumf %185, %186 : vector<8x1xf32>
    %cst_100 = arith.constant 9.99999974E-6 : f32
    %188 = vector.broadcast %cst_100 : f32 to vector<8x1xf32>
    %189 = arith.addf %187, %188 : vector<8x1xf32>
    %190 = math.rsqrt %189 : vector<8x1xf32>
    %cst_101 = arith.constant 0.000000e+00 : f32
    %191 = vector.broadcast %cst_101 : f32 to vector<8x1xf32>
    %192 = arith.subf %191, %181 : vector<8x1xf32>
    %193 = arith.mulf %192, %190 : vector<8x1xf32>
    %194 = vector.extract_strided_slice %137 {offsets = [0, 0], sizes = [8, 384], strides = [1, 1]} : vector<32x384xf32> to vector<8x384xf32>
    %195 = vector.broadcast %190 : vector<8x1xf32> to vector<8x384xf32>
    %196 = arith.mulf %194, %195 : vector<8x384xf32>
    %197 = vector.broadcast %193 : vector<8x1xf32> to vector<8x384xf32>
    %198 = arith.addf %196, %197 : vector<8x384xf32>
    %cst_102 = arith.constant 2.000000e-01 : f32
    %199 = vector.broadcast %cst_102 : f32 to vector<8x384xf32>
    %200 = arith.mulf %199, %198 : vector<8x384xf32>
    %201 = arith.maximumf %198, %200 : vector<8x384xf32>
    %c1_103 = arith.constant 1 : index
    %c0_104 = arith.constant 0 : index
    %c0_105 = arith.constant 0 : index
    %c0_106 = arith.constant 0 : index
    %202 = vector.load %arg4[%c1_103, %c0_104, %c0_105, %c0_106] : memref<2x4x8x384xf32, #tpu.memory_space<vmem>>, vector<1x1x8x384xf32>
    %203 = vector.shape_cast %202 : vector<1x1x8x384xf32> to vector<8x384xf32>
    %204 = vector.shape_cast %201 : vector<8x384xf32> to vector<1x1x8x384xf32>
    tpu.vector_store %arg4[%c1_103, %c0_104, %c0_105, %c0_106], %204 {strides = array<i32>} : memref<2x4x8x384xf32, #tpu.memory_space<vmem>>, vector<1x1x8x384xf32>,
    %205 = vector.extract_strided_slice %137 {offsets = [8, 0], sizes = [8, 384], strides = [1, 1]} : vector<32x384xf32> to vector<8x384xf32>
    %206 = vector.broadcast %190 : vector<8x1xf32> to vector<8x384xf32>
    %207 = arith.mulf %205, %206 : vector<8x384xf32>
    %208 = vector.broadcast %193 : vector<8x1xf32> to vector<8x384xf32>
    %209 = arith.addf %207, %208 : vector<8x384xf32>
    %cst_107 = arith.constant 2.000000e-01 : f32
    %210 = vector.broadcast %cst_107 : f32 to vector<8x384xf32>
    %211 = arith.mulf %210, %209 : vector<8x384xf32>
    %212 = arith.maximumf %209, %211 : vector<8x384xf32>
    %c1_108 = arith.constant 1 : index
    %c1_109 = arith.constant 1 : index
    %c0_110 = arith.constant 0 : index
    %c0_111 = arith.constant 0 : index
    %213 = vector.load %arg4[%c1_108, %c1_109, %c0_110, %c0_111] : memref<2x4x8x384xf32, #tpu.memory_space<vmem>>, vector<1x1x8x384xf32>
    %214 = vector.shape_cast %213 : vector<1x1x8x384xf32> to vector<8x384xf32>
    %215 = vector.shape_cast %212 : vector<8x384xf32> to vector<1x1x8x384xf32>
    tpu.vector_store %arg4[%c1_108, %c1_109, %c0_110, %c0_111], %215 {strides = array<i32>} : memref<2x4x8x384xf32, #tpu.memory_space<vmem>>, vector<1x1x8x384xf32>,
    %216 = vector.extract_strided_slice %137 {offsets = [16, 0], sizes = [8, 384], strides = [1, 1]} : vector<32x384xf32> to vector<8x384xf32>
    %217 = vector.broadcast %190 : vector<8x1xf32> to vector<8x384xf32>
    %218 = arith.mulf %216, %217 : vector<8x384xf32>
    %219 = vector.broadcast %193 : vector<8x1xf32> to vector<8x384xf32>
    %220 = arith.addf %218, %219 : vector<8x384xf32>
    %cst_112 = arith.constant 2.000000e-01 : f32
    %221 = vector.broadcast %cst_112 : f32 to vector<8x384xf32>
    %222 = arith.mulf %221, %220 : vector<8x384xf32>
    %223 = arith.maximumf %220, %222 : vector<8x384xf32>
    %c1_113 = arith.constant 1 : index
    %c2_114 = arith.constant 2 : index
    %c0_115 = arith.constant 0 : index
    %c0_116 = arith.constant 0 : index
    %224 = vector.load %arg4[%c1_113, %c2_114, %c0_115, %c0_116] : memref<2x4x8x384xf32, #tpu.memory_space<vmem>>, vector<1x1x8x384xf32>
    %225 = vector.shape_cast %224 : vector<1x1x8x384xf32> to vector<8x384xf32>
    %226 = vector.shape_cast %223 : vector<8x384xf32> to vector<1x1x8x384xf32>
    tpu.vector_store %arg4[%c1_113, %c2_114, %c0_115, %c0_116], %226 {strides = array<i32>} : memref<2x4x8x384xf32, #tpu.memory_space<vmem>>, vector<1x1x8x384xf32>,
    %227 = vector.extract_strided_slice %137 {offsets = [24, 0], sizes = [8, 384], strides = [1, 1]} : vector<32x384xf32> to vector<8x384xf32>
    %228 = vector.broadcast %190 : vector<8x1xf32> to vector<8x384xf32>
    %229 = arith.mulf %227, %228 : vector<8x384xf32>
    %230 = vector.broadcast %193 : vector<8x1xf32> to vector<8x384xf32>
    %231 = arith.addf %229, %230 : vector<8x384xf32>
    %cst_117 = arith.constant 2.000000e-01 : f32
    %232 = vector.broadcast %cst_117 : f32 to vector<8x384xf32>
    %233 = arith.mulf %232, %231 : vector<8x384xf32>
    %234 = arith.maximumf %231, %233 : vector<8x384xf32>
    %c1_118 = arith.constant 1 : index
    %c3_119 = arith.constant 3 : index
    %c0_120 = arith.constant 0 : index
    %c0_121 = arith.constant 0 : index
    %235 = vector.load %arg4[%c1_118, %c3_119, %c0_120, %c0_121] : memref<2x4x8x384xf32, #tpu.memory_space<vmem>>, vector<1x1x8x384xf32>
    %236 = vector.shape_cast %235 : vector<1x1x8x384xf32> to vector<8x384xf32>
    %237 = vector.shape_cast %234 : vector<8x384xf32> to vector<1x1x8x384xf32>
    tpu.vector_store %arg4[%c1_118, %c3_119, %c0_120, %c0_121], %237 {strides = array<i32>} : memref<2x4x8x384xf32, #tpu.memory_space<vmem>>, vector<1x1x8x384xf32>,
    return
  }
  func.func @transform_0(%arg0: i32) -> (i32, i32, i32) {
    %c0_i32 = arith.constant 0 : i32
    %c0_i32_0 = arith.constant 0 : i32
    %c0_i32_1 = arith.constant 0 : i32
    return %arg0, %c0_i32, %c0_i32_0 : i32, i32, i32
  }
  func.func @transform_1(%arg0: i32) -> (i32, i32) {
    %c0_i32 = arith.constant 0 : i32
    %c0_i32_0 = arith.constant 0 : i32
    %c0_i32_1 = arith.constant 0 : i32
    return %c0_i32, %c0_i32_0 : i32, i32
  }
  func.func @transform_2(%arg0: i32) -> (i32, i32, i32) {
    %c0_i32 = arith.constant 0 : i32
    %c0_i32_0 = arith.constant 0 : i32
    %c0_i32_1 = arith.constant 0 : i32
    %c0_i32_2 = arith.constant 0 : i32
    return %c0_i32, %c0_i32_0, %c0_i32_1 : i32, i32, i32
  }
  func.func @transform_3(%arg0: i32) -> (i32, i32, i32, i32) {
    %c0_i32 = arith.constant 0 : i32
    %c0_i32_0 = arith.constant 0 : i32
    %c0_i32_1 = arith.constant 0 : i32
    %c0_i32_2 = arith.constant 0 : i32
    return %arg0, %c0_i32, %c0_i32_0, %c0_i32_1 : i32, i32, i32, i32
  }
}

</mosaic_0001>

<llo_original>
// kernel: cnn_trans2d_layer.1
$region0: #{cnn_trans2d_layer.1}
  #allocation0 [shape = 'u32[]', space=smem, size = 0x4, offset = 0x4, fixed_abs, tag = 'smem constant byte address 0x4 - core index']
  #allocation1 [shape = 'u32[144,128]{1,0:T(1,128)}', space=vmem, size = 0x12000, scoped, tag = 'internal scratch']
  #allocation2 [shape = 'f32[32,384]{1,0:T(8,128)}', space=vmem, size = 0xc000, scoped, tag = 'scratch operand']
  %s0 = inlined_call_operand.vmem [shape: f32[2,8,403], index: 0, kind: input, shape index: {}]
  %s1 = inlined_call_operand.vmem [shape: f32[32,32], index: 1, kind: input, shape index: {}]
  %s2 = inlined_call_operand.hbm [shape: f32[4,1,384], index: 2, kind: input, shape index: {}]
  %s3 = inlined_call_operand.vmem [shape: f32[2,4,8,384], index: 3, kind: output, shape index: {}]
  %s4 = sld [smem:[#allocation0]]
  $region26: #{cnn_trans2d_layer.1} parent=0
    _
  %s6 = ssub.s32 1, %s4
  %s7 = scalar_select 0, %s6, %s4
  $region1: #{cnn_trans2d_layer.1} parent=0
    #allocation3 [shape = 'u8[6144]{0}', space=vmem, size = 0x1800, scoped, tag = 'input window, operand 2, single buffered']
    #allocation4 [shape = 's32[1]{0}', space=sflag, size = 0x4, scoped, tag = 'scoped memory for cnn_trans2d_layer.1']
    %8 = vsyncpa [#allocation4], 0
    // Predicated region
    $region2: #{cnn_trans2d_layer.1} parent=1 // pred_check
      _
    $region3: #{cnn_trans2d_layer.1} parent=1 // pred_check_branch
      %10 = sbr.rel (0) target = $region5
    $region4: #{cnn_trans2d_layer.1} parent=1 // pred_region
      _
    $region5: #{cnn_trans2d_layer.1} parent=1 // pred_fallthru
      _
    // Predicated region
    $region6: #{cnn_trans2d_layer.1} parent=1 // pred_check
      _
    $region7: #{cnn_trans2d_layer.1} parent=1 // pred_check_branch
      %12 = sbr.rel (0) target = $region9
    $region8: #{cnn_trans2d_layer.1} parent=1 // pred_region
      _
    $region9: #{cnn_trans2d_layer.1} parent=1 // pred_fallthru
      _
    // Predicated region
    $region10: #{cnn_trans2d_layer.1} parent=1 // pred_check
      _
    $region11: #{cnn_trans2d_layer.1} parent=1 // pred_check_branch
      %14 = sbr.rel (0) target = $region13
    $region12: #{cnn_trans2d_layer.1} parent=1 // pred_region
      %s16 = ssub.s32 192, 192
      %17 = vsyncadd [#allocation4], %s16
      %s18 = sshll.u32 [#allocation3], 4
      %s19 = int_to_ptr.vmem [resolvable:$true] %s18
      %24 = dma.hbm_to_vmem [thread:$0]  %s2, 192, %s19, [#allocation4], 48, 48, 3
    $region13: #{cnn_trans2d_layer.1} parent=1 // pred_fallthru
      _
    // Predicated region
    $region14: #{cnn_trans2d_layer.1} parent=1 // pred_check
      _
    $region15: #{cnn_trans2d_layer.1} parent=1 // pred_check_branch
      %26 = sbr.rel (0) target = $region17
    $region16: #{cnn_trans2d_layer.1} parent=1 // pred_region
      %27 = dma.done [#allocation4], 192
    $region17: #{cnn_trans2d_layer.1} parent=1 // pred_fallthru
      _
    %v28 = vld [vmem:[#allocation3] sm:$0x7]
    %s29 = scalar_lea.vmem [#allocation3], 3
    %v30 = vld [vmem:[%s29] sm:$0x7]
    %s31 = scalar_lea.vmem [#allocation3], 6
    %v32 = vld [vmem:[%s31] sm:$0x7]
    %s33 = scalar_lea.vmem [#allocation3], 9
    %v34 = vld [vmem:[%s33] sm:$0x7]
    %v35 = vld [vmem:[%s0] sm:$0xff]
    %v36 = vld [vmem:[%s0 + $0x8] sm:$0xff]
    %v37 = vld [vmem:[%s0 + $0x10] sm:$0xff]
    %38 = vst [vmem:[#allocation2] sm:$0xff] %v35
    %39 = vst [vmem:[#allocation2 + $0x8] sm:$0xff] %v36
    %40 = vst [vmem:[#allocation2 + $0x10] sm:$0xff] %v37
    %v41 = vld [vmem:[%s0] sm:$0xff]
    %v42 = vld [vmem:[%s0 + $0x8] sm:$0xff]
    %v43 = vld [vmem:[%s0 + $0x10] sm:$0xff]
    %v44 = vld [vmem:[%s0 + $0x18] sm:$0xff]
    %49 = vrot.lane.b32.xlu0 %v41, 127
    %v50 = vpop.permute.xlu0 %49
    %51 = vrot.lane.b32.xlu0 %v42, 127
    %v52 = vpop.permute.xlu0 %51
    %53 = vrot.lane.b32.xlu0 %v43, 127
    %v54 = vpop.permute.xlu0 %53
    %55 = vrot.lane.b32.xlu0 %v44, 127
    %v56 = vpop.permute.xlu0 %55
    %vm57 = vcmask 1039360
    %v58 = vsel %vm57, %v50, %v52
    %v59 = vsel %vm57, %v52, %v54
    %v60 = vsel %vm57, %v54, %v56
    %64 = vst [vmem:[#allocation2 + $0x18] sm:$0xff] %v58
    %65 = vst [vmem:[#allocation2 + $0x20] sm:$0xff] %v59
    %66 = vst [vmem:[#allocation2 + $0x28] sm:$0xff] %v60
    %v67 = vld [vmem:[%s0] sm:$0xff]
    %v68 = vld [vmem:[%s0 + $0x8] sm:$0xff]
    %v69 = vld [vmem:[%s0 + $0x10] sm:$0xff]
    %v70 = vld [vmem:[%s0 + $0x18] sm:$0xff]
    %75 = vrot.lane.b32.xlu0 %v67, 110
    %v76 = vpop.permute.xlu0 %75
    %77 = vrot.lane.b32.xlu0 %v68, 110
    %v78 = vpop.permute.xlu0 %77
    %79 = vrot.lane.b32.xlu0 %v69, 110
    %v80 = vpop.permute.xlu0 %79
    %81 = vrot.lane.b32.xlu0 %v70, 110
    %v82 = vpop.permute.xlu0 %81
    %vm83 = vcmask 900096
    %v84 = vsel %vm83, %v76, %v78
    %v85 = vsel %vm83, %v78, %v80
    %v86 = vsel %vm83, %v80, %v82
    %90 = vst [vmem:[#allocation2 + $0x30] sm:$0xff] %v84
    %91 = vst [vmem:[#allocation2 + $0x38] sm:$0xff] %v85
    %92 = vst [vmem:[#allocation2 + $0x40] sm:$0xff] %v86
    %v93 = vld [vmem:[%s0] sm:$0xff]
    %v94 = vld [vmem:[%s0 + $0x8] sm:$0xff]
    %v95 = vld [vmem:[%s0 + $0x10] sm:$0xff]
    %v96 = vld [vmem:[%s0 + $0x18] sm:$0xff]
    %101 = vrot.lane.b32.xlu0 %v93, 109
    %v102 = vpop.permute.xlu0 %101
    %103 = vrot.lane.b32.xlu0 %v94, 109
    %v104 = vpop.permute.xlu0 %103
    %105 = vrot.lane.b32.xlu0 %v95, 109
    %v106 = vpop.permute.xlu0 %105
    %107 = vrot.lane.b32.xlu0 %v96, 109
    %v108 = vpop.permute.xlu0 %107
    %vm109 = vcmask 891904
    %v110 = vsel %vm109, %v102, %v104
    %v111 = vsel %vm109, %v104, %v106
    %v112 = vsel %vm109, %v106, %v108
    %116 = vst [vmem:[#allocation2 + $0x48] sm:$0xff] %v110
    %117 = vst [vmem:[#allocation2 + $0x50] sm:$0xff] %v111
    %118 = vst [vmem:[#allocation2 + $0x58] sm:$0xff] %v112
    %v119 = vld [vmem:[%s1] sm:$0xff]
    %v120 = vld [vmem:[%s1 + $0x8] sm:$0xff]
    %v121 = vld [vmem:[%s1 + $0x10] sm:$0xff]
    %v122 = vld [vmem:[%s1 + $0x18] sm:$0xff]
    %v123 = vld [vmem:[#allocation2] sm:$0xff]
    %v124 = vld [vmem:[#allocation2 + $0x8] sm:$0xff]
    %v125 = vld [vmem:[#allocation2 + $0x10] sm:$0xff]
    %v126 = vld [vmem:[#allocation2 + $0x18] sm:$0xff]
    %v127 = vld [vmem:[#allocation2 + $0x20] sm:$0xff]
    %v128 = vld [vmem:[#allocation2 + $0x28] sm:$0xff]
    %v129 = vld [vmem:[#allocation2 + $0x30] sm:$0xff]
    %v130 = vld [vmem:[#allocation2 + $0x38] sm:$0xff]
    %v131 = vld [vmem:[#allocation2 + $0x40] sm:$0xff]
    %v132 = vld [vmem:[#allocation2 + $0x48] sm:$0xff]
    %v133 = vld [vmem:[#allocation2 + $0x50] sm:$0xff]
    %v134 = vld [vmem:[#allocation2 + $0x58] sm:$0xff]
    %vm135 = vcmask 261120
    %v137 = vsel %vm135, %v119, 0
    %v140 = vsel %vm135, %v120, 0
    %v143 = vsel %vm135, %v121, 0
    %v146 = vsel %vm135, %v122, 0
    %148 = vmatprep.subr.mxu0 %v124
    %149 = vmatpush1.msra.mxu0 %v123
    %150 = vmatprep.subr.mxu0 %v127
    %151 = vmatpush1.msra.mxu0 %v126
    %152 = vmatprep.subr.mxu0 %v130
    %153 = vmatpush1.msra.mxu0 %v129
    %154 = vmatprep.subr.mxu0 %v133
    %155 = vmatpush1.msra.mxu0 %v132
    %156 = vmatprep.subr.mxu0 0.0
    %157 = vmatpush1.msra.mxu0 0.0
    %158 = vmatprep.subr.mxu0 0.0
    %159 = vmatpush1.msra.mxu0 0.0
    %160 = vmatprep.subr.mxu0 0.0
    %161 = vmatpush1.msra.mxu0 0.0
    %162 = vmatprep.subr.mxu0 0.0
    %163 = vmatpush1.msra.mxu0 0.0
    %164 = vmatprep.subr.mxu0 0.0
    %165 = vmatpush1.msra.mxu0 0.0
    %166 = vmatprep.subr.mxu0 0.0
    %167 = vmatpush1.msra.mxu0 0.0
    %168 = vmatprep.subr.mxu0 0.0
    %169 = vmatpush1.msra.mxu0 0.0
    %170 = vmatprep.subr.mxu0 0.0
    %171 = vmatpush1.msra.mxu0 0.0
    %172 = vmatprep.subr.mxu0 0.0
    %173 = vmatpush1.msra.mxu0 0.0
    %174 = vmatprep.subr.mxu0 0.0
    %175 = vmatpush1.msra.mxu0 0.0
    %176 = vmatprep.subr.mxu0 0.0
    %177 = vmatpush1.msra.mxu0 0.0
    %178 = vmatprep.subr.mxu0 0.0
    %179 = vmatpush1.msra.mxu0 0.0
    %180 = vmatprep.subr.mxu0 0.0
    %181 = vmatpush1.msra.mxu0 0.0
    %182 = vmatprep.subr.mxu0 0.0
    %183 = vmatpush1.msra.mxu0 0.0
    %184 = vmatprep.subr.mxu0 0.0
    %185 = vmatpush1.msra.mxu0 0.0
    %186 = vmatprep.subr.mxu0 0.0
    %187 = vmatpush1.msra.mxu0 0.0
    %188 = vmatprep.subr.mxu0 0.0
    %189 = vmatpush1.msra.mxu0 0.0
    %190 = vmatprep.subr.mxu0 0.0
    %191 = vmatpush1.msra.mxu0 0.0
    %192 = vmatprep.subr.mxu0 0.0
    %193 = vmatpush1.msra.mxu0 0.0
    %194 = vmatprep.subr.mxu0 0.0
    %195 = vmatpush1.msra.mxu0 0.0
    %196 = vmatprep.subr.mxu0 0.0
    %197 = vmatpush1.msra.mxu0 0.0
    %198 = vmatprep.subr.mxu0 0.0
    %199 = vmatpush1.msra.mxu0 0.0
    %200 = vmatprep.subr.mxu0 0.0
    %201 = vmatpush1.msra.mxu0 0.0
    %202 = vmatprep.subr.mxu0 0.0
    %203 = vmatpush1.msra.mxu0 0.0
    %204 = vmatprep.subr.mxu0 0.0
    %205 = vmatpush1.msra.mxu0 0.0
    %206 = vmatprep.subr.mxu0 0.0
    %207 = vmatpush1.msra.mxu0 0.0
    %208 = vmatprep.subr.mxu0 0.0
    %209 = vmatpush1.msra.mxu0 0.0
    %210 = vmatprep.subr.mxu0 0.0
    %211 = vmatpush1.msra.mxu0 0.0
    %212 = vmatprep.mubr.f32.mxu0 0.0
    %213 = vmatmul.mubr.f32.gmra.mrb[0].mxu0 %v137
    %v214 = vpop.f32.mrb[0].mxu0
    %v215 = vadd.f32 0.0, %v214
    %v216 = vpop.f32.mrb[0].mxu0
    %v217 = vadd.f32 0.0, %v216
    %218 = vmatprep.mubr.f32.mxu0 0.0
    %219 = vmatmul.mubr.f32.gmra.mrb[0].mxu0 %v140
    %v220 = vpop.f32.mrb[0].mxu0
    %v221 = vadd.f32 0.0, %v220
    %v222 = vpop.f32.mrb[0].mxu0
    %v223 = vadd.f32 0.0, %v222
    %224 = vmatprep.mubr.f32.mxu0 0.0
    %225 = vmatmul.mubr.f32.gmra.mrb[0].mxu0 %v143
    %v226 = vpop.f32.mrb[0].mxu0
    %v227 = vadd.f32 0.0, %v226
    %v228 = vpop.f32.mrb[0].mxu0
    %v229 = vadd.f32 0.0, %v228
    %230 = vmatprep.mubr.f32.mxu0 0.0
    %231 = vmatmul.mubr.f32.gmra.mrb[0].mxu0 %v146
    %v232 = vpop.f32.mrb[0].mxu0
    %v233 = vadd.f32 0.0, %v232
    %v234 = vpop.f32.mrb[0].mxu0
    %v235 = vadd.f32 0.0, %v234
    %236 = vdwg.mxu0
    %237 = vmatprep.subr.mxu0 0.0
    %238 = vmatpush1.msra.mxu0 %v125
    %239 = vmatprep.subr.mxu0 0.0
    %240 = vmatpush1.msra.mxu0 %v128
    %241 = vmatprep.subr.mxu0 0.0
    %242 = vmatpush1.msra.mxu0 %v131
    %243 = vmatprep.subr.mxu0 0.0
    %244 = vmatpush1.msra.mxu0 %v134
    %245 = vmatprep.subr.mxu0 0.0
    %246 = vmatpush1.msra.mxu0 0.0
    %247 = vmatprep.subr.mxu0 0.0
    %248 = vmatpush1.msra.mxu0 0.0
    %249 = vmatprep.subr.mxu0 0.0
    %250 = vmatpush1.msra.mxu0 0.0
    %251 = vmatprep.subr.mxu0 0.0
    %252 = vmatpush1.msra.mxu0 0.0
    %253 = vmatprep.subr.mxu0 0.0
    %254 = vmatpush1.msra.mxu0 0.0
    %255 = vmatprep.subr.mxu0 0.0
    %256 = vmatpush1.msra.mxu0 0.0
    %257 = vmatprep.subr.mxu0 0.0
    %258 = vmatpush1.msra.mxu0 0.0
    %259 = vmatprep.subr.mxu0 0.0
    %260 = vmatpush1.msra.mxu0 0.0
    %261 = vmatprep.subr.mxu0 0.0
    %262 = vmatpush1.msra.mxu0 0.0
    %263 = vmatprep.subr.mxu0 0.0
    %264 = vmatpush1.msra.mxu0 0.0
    %265 = vmatprep.subr.mxu0 0.0
    %266 = vmatpush1.msra.mxu0 0.0
    %267 = vmatprep.subr.mxu0 0.0
    %268 = vmatpush1.msra.mxu0 0.0
    %269 = vmatprep.subr.mxu0 0.0
    %270 = vmatpush1.msra.mxu0 0.0
    %271 = vmatprep.subr.mxu0 0.0
    %272 = vmatpush1.msra.mxu0 0.0
    %273 = vmatprep.subr.mxu0 0.0
    %274 = vmatpush1.msra.mxu0 0.0
    %275 = vmatprep.subr.mxu0 0.0
    %276 = vmatpush1.msra.mxu0 0.0
    %277 = vmatprep.subr.mxu0 0.0
    %278 = vmatpush1.msra.mxu0 0.0
    %279 = vmatprep.subr.mxu0 0.0
    %280 = vmatpush1.msra.mxu0 0.0
    %281 = vmatprep.subr.mxu0 0.0
    %282 = vmatpush1.msra.mxu0 0.0
    %283 = vmatprep.subr.mxu0 0.0
    %284 = vmatpush1.msra.mxu0 0.0
    %285 = vmatprep.subr.mxu0 0.0
    %286 = vmatpush1.msra.mxu0 0.0
    %287 = vmatprep.subr.mxu0 0.0
    %288 = vmatpush1.msra.mxu0 0.0
    %289 = vmatprep.subr.mxu0 0.0
    %290 = vmatpush1.msra.mxu0 0.0
    %291 = vmatprep.subr.mxu0 0.0
    %292 = vmatpush1.msra.mxu0 0.0
    %293 = vmatprep.subr.mxu0 0.0
    %294 = vmatpush1.msra.mxu0 0.0
    %295 = vmatprep.subr.mxu0 0.0
    %296 = vmatpush1.msra.mxu0 0.0
    %297 = vmatprep.subr.mxu0 0.0
    %298 = vmatpush1.msra.mxu0 0.0
    %299 = vmatprep.subr.mxu0 0.0
    %300 = vmatpush1.msra.mxu0 0.0
    %301 = vmatprep.mubr.f32.mxu0 0.0
    %302 = vmatmul.mubr.f32.gmra.mrb[0].mxu0 %v137
    %v303 = vpop.f32.mrb[0].mxu0
    %v304 = vadd.f32 0.0, %v303
    %v305 = vpop.f32.mrb[0].mxu0
    %306 = vmatprep.mubr.f32.mxu0 0.0
    %307 = vmatmul.mubr.f32.gmra.mrb[0].mxu0 %v140
    %v308 = vpop.f32.mrb[0].mxu0
    %v309 = vadd.f32 0.0, %v308
    %v310 = vpop.f32.mrb[0].mxu0
    %311 = vmatprep.mubr.f32.mxu0 0.0
    %312 = vmatmul.mubr.f32.gmra.mrb[0].mxu0 %v143
    %v313 = vpop.f32.mrb[0].mxu0
    %v314 = vadd.f32 0.0, %v313
    %v315 = vpop.f32.mrb[0].mxu0
    %316 = vmatprep.mubr.f32.mxu0 0.0
    %317 = vmatmul.mubr.f32.gmra.mrb[0].mxu0 %v146
    %v318 = vpop.f32.mrb[0].mxu0
    %v319 = vadd.f32 0.0, %v318
    %v320 = vpop.f32.mrb[0].mxu0
    %321 = vdwg.mxu0
    %v323 = vlaneseq
    %v324 = vshrl.u32 %v323, 7
    %v325 = vsub.s32 0, %v324
    %v326 = vrot.slane %v28, %v325
    %v327 = vlaneseq
    %v328 = vshrl.u32 %v327, 7
    %v329 = vsub.s32 1, %v328
    %v330 = vrot.slane %v28, %v329
    %v331 = vlaneseq
    %v332 = vshrl.u32 %v331, 7
    %v333 = vsub.s32 2, %v332
    %v334 = vrot.slane %v28, %v333
    %v338 = vmul.f32 %v215, %v326
    %v339 = vmul.f32 %v217, %v330
    %v340 = vmul.f32 %v304, %v334
    %v341 = vadd.f32 %v338, %v339
    %v342 = vadd.f32 %v341, %v340
    %343 = vadd.xlane.f32.xlu0 %v342
    %v344 = vpop.xlane.xlu0 %343
    %v345 = vadd.f32 %v344, 0.0
    %v346 = vmul.f32 %v338, %v338
    %v347 = vmul.f32 %v339, %v339
    %v348 = vmul.f32 %v340, %v340
    %v349 = vadd.f32 %v346, %v347
    %v350 = vadd.f32 %v349, %v348
    %351 = vadd.xlane.f32.xlu0 %v350
    %v352 = vpop.xlane.xlu0 %351
    %v353 = vadd.f32 %v352, 0.0
    %v355 = vlaneseq
    %v356 = vshrl.u32 %v355, 7
    %v357 = vsub.s32 0, %v356
    %v358 = vrot.slane %v30, %v357
    %v359 = vlaneseq
    %v360 = vshrl.u32 %v359, 7
    %v361 = vsub.s32 1, %v360
    %v362 = vrot.slane %v30, %v361
    %v363 = vlaneseq
    %v364 = vshrl.u32 %v363, 7
    %v365 = vsub.s32 2, %v364
    %v366 = vrot.slane %v30, %v365
    %v370 = vmul.f32 %v221, %v358
    %v371 = vmul.f32 %v223, %v362
    %v372 = vmul.f32 %v309, %v366
    %v373 = vadd.f32 %v370, %v371
    %v374 = vadd.f32 %v373, %v372
    %375 = vadd.xlane.f32.xlu0 %v374
    %v376 = vpop.xlane.xlu0 %375
    %v377 = vadd.f32 %v345, %v376
    %v378 = vmul.f32 %v370, %v370
    %v379 = vmul.f32 %v371, %v371
    %v380 = vmul.f32 %v372, %v372
    %v381 = vadd.f32 %v378, %v379
    %v382 = vadd.f32 %v381, %v380
    %383 = vadd.xlane.f32.xlu0 %v382
    %v384 = vpop.xlane.xlu0 %383
    %v385 = vadd.f32 %v353, %v384
    %v387 = vlaneseq
    %v388 = vshrl.u32 %v387, 7
    %v389 = vsub.s32 0, %v388
    %v390 = vrot.slane %v32, %v389
    %v391 = vlaneseq
    %v392 = vshrl.u32 %v391, 7
    %v393 = vsub.s32 1, %v392
    %v394 = vrot.slane %v32, %v393
    %v395 = vlaneseq
    %v396 = vshrl.u32 %v395, 7
    %v397 = vsub.s32 2, %v396
    %v398 = vrot.slane %v32, %v397
    %v402 = vmul.f32 %v227, %v390
    %v403 = vmul.f32 %v229, %v394
    %v404 = vmul.f32 %v314, %v398
    %v405 = vadd.f32 %v402, %v403
    %v406 = vadd.f32 %v405, %v404
    %407 = vadd.xlane.f32.xlu0 %v406
    %v408 = vpop.xlane.xlu0 %407
    %v409 = vadd.f32 %v377, %v408
    %v410 = vmul.f32 %v402, %v402
    %v411 = vmul.f32 %v403, %v403
    %v412 = vmul.f32 %v404, %v404
    %v413 = vadd.f32 %v410, %v411
    %v414 = vadd.f32 %v413, %v412
    %415 = vadd.xlane.f32.xlu0 %v414
    %v416 = vpop.xlane.xlu0 %415
    %v417 = vadd.f32 %v385, %v416
    %v419 = vlaneseq
    %v420 = vshrl.u32 %v419, 7
    %v421 = vsub.s32 0, %v420
    %v422 = vrot.slane %v34, %v421
    %v423 = vlaneseq
    %v424 = vshrl.u32 %v423, 7
    %v425 = vsub.s32 1, %v424
    %v426 = vrot.slane %v34, %v425
    %v427 = vlaneseq
    %v428 = vshrl.u32 %v427, 7
    %v429 = vsub.s32 2, %v428
    %v430 = vrot.slane %v34, %v429
    %v434 = vmul.f32 %v233, %v422
    %v435 = vmul.f32 %v235, %v426
    %v436 = vmul.f32 %v319, %v430
    %v437 = vadd.f32 %v434, %v435
    %v438 = vadd.f32 %v437, %v436
    %439 = vadd.xlane.f32.xlu0 %v438
    %v440 = vpop.xlane.xlu0 %439
    %v441 = vadd.f32 %v409, %v440
    %v442 = vmul.f32 %v434, %v434
    %v443 = vmul.f32 %v435, %v435
    %v444 = vmul.f32 %v436, %v436
    %v445 = vadd.f32 %v442, %v443
    %v446 = vadd.f32 %v445, %v444
    %447 = vadd.xlane.f32.xlu0 %v446
    %v448 = vpop.xlane.xlu0 %447
    %v449 = vadd.f32 %v417, %v448
    %v450 = vmul.f32 %v441, 0.0009765625
    %v451 = vmul.f32 %v449, 0.0009765625
    %v452 = vmul.f32 %v450, %v450
    %v453 = vsub.f32 %v451, %v452
    %v454 = vmax.f32 %v453, 0.0
    %v455 = vadd.f32 %v454, 1e-05
    %v456 = vrsqrt.pop %v455
    %v457 = vsub.f32 0.0, %v450
    %v458 = vmul.f32 %v457, %v456
    %v459 = vmul.f32 %v215, %v456
    %v460 = vmul.f32 %v217, %v456
    %v461 = vmul.f32 %v304, %v456
    %v462 = vadd.f32 %v459, %v458
    %v463 = vadd.f32 %v460, %v458
    %v464 = vadd.f32 %v461, %v458
    %v465 = vmul.f32 %v462, 0.2
    %v466 = vmul.f32 %v463, 0.2
    %v467 = vmul.f32 %v464, 0.2
    %v468 = vmax.f32 %v462, %v465
    %v469 = vmax.f32 %v463, %v466
    %v470 = vmax.f32 %v464, %v467
    %471 = vst [vmem:[%s3] sm:$0xff] %v468
    %472 = vst [vmem:[%s3 + $0x8] sm:$0xff] %v469
    %473 = vst [vmem:[%s3 + $0x10] sm:$0xff] %v470
    %v474 = vmul.f32 %v221, %v456
    %v475 = vmul.f32 %v223, %v456
    %v476 = vmul.f32 %v309, %v456
    %v477 = vadd.f32 %v474, %v458
    %v478 = vadd.f32 %v475, %v458
    %v479 = vadd.f32 %v476, %v458
    %v480 = vmul.f32 %v477, 0.2
    %v481 = vmul.f32 %v478, 0.2
    %v482 = vmul.f32 %v479, 0.2
    %v483 = vmax.f32 %v477, %v480
    %v484 = vmax.f32 %v478, %v481
    %v485 = vmax.f32 %v479, %v482
    %s486 = scalar_lea.vmem %s3, 24
    %487 = vst [vmem:[%s486] sm:$0xff] %v483
    %488 = vst [vmem:[%s486 + $0x8] sm:$0xff] %v484
    %489 = vst [vmem:[%s486 + $0x10] sm:$0xff] %v485
    %v490 = vmul.f32 %v227, %v456
    %v491 = vmul.f32 %v229, %v456
    %v492 = vmul.f32 %v314, %v456
    %v493 = vadd.f32 %v490, %v458
    %v494 = vadd.f32 %v491, %v458
    %v495 = vadd.f32 %v492, %v458
    %v496 = vmul.f32 %v493, 0.2
    %v497 = vmul.f32 %v494, 0.2
    %v498 = vmul.f32 %v495, 0.2
    %v499 = vmax.f32 %v493, %v496
    %v500 = vmax.f32 %v494, %v497
    %v501 = vmax.f32 %v495, %v498
    %s502 = scalar_lea.vmem %s3, 48
    %503 = vst [vmem:[%s502] sm:$0xff] %v499
    %504 = vst [vmem:[%s502 + $0x8] sm:$0xff] %v500
    %505 = vst [vmem:[%s502 + $0x10] sm:$0xff] %v501
    %v506 = vmul.f32 %v233, %v456
    %v507 = vmul.f32 %v235, %v456
    %v508 = vmul.f32 %v319, %v456
    %v509 = vadd.f32 %v506, %v458
    %v510 = vadd.f32 %v507, %v458
    %v511 = vadd.f32 %v508, %v458
    %v512 = vmul.f32 %v509, 0.2
    %v513 = vmul.f32 %v510, 0.2
    %v514 = vmul.f32 %v511, 0.2
    %v515 = vmax.f32 %v509, %v512
    %v516 = vmax.f32 %v510, %v513
    %v517 = vmax.f32 %v511, %v514
    %s518 = scalar_lea.vmem %s3, 72
    %519 = vst [vmem:[%s518] sm:$0xff] %v515
    %520 = vst [vmem:[%s518 + $0x8] sm:$0xff] %v516
    %521 = vst [vmem:[%s518 + $0x10] sm:$0xff] %v517
    %s522 = scalar_lea.vmem %s0, 32
    %v523 = vld [vmem:[%s522] sm:$0xff]
    %v524 = vld [vmem:[%s522 + $0x8] sm:$0xff]
    %v525 = vld [vmem:[%s522 + $0x10] sm:$0xff]
    %526 = vst [vmem:[#allocation2] sm:$0xff] %v523
    %527 = vst [vmem:[#allocation2 + $0x8] sm:$0xff] %v524
    %528 = vst [vmem:[#allocation2 + $0x10] sm:$0xff] %v525
    %v529 = vld [vmem:[%s522] sm:$0xff]
    %v530 = vld [vmem:[%s522 + $0x8] sm:$0xff]
    %v531 = vld [vmem:[%s522 + $0x10] sm:$0xff]
    %v532 = vld [vmem:[%s522 + $0x18] sm:$0xff]
    %537 = vrot.lane.b32.xlu0 %v529, 127
    %v538 = vpop.permute.xlu0 %537
    %539 = vrot.lane.b32.xlu0 %v530, 127
    %v540 = vpop.permute.xlu0 %539
    %541 = vrot.lane.b32.xlu0 %v531, 127
    %v542 = vpop.permute.xlu0 %541
    %543 = vrot.lane.b32.xlu0 %v532, 127
    %v544 = vpop.permute.xlu0 %543
    %v545 = vsel %vm57, %v538, %v540
    %v546 = vsel %vm57, %v540, %v542
    %v547 = vsel %vm57, %v542, %v544
    %551 = vst [vmem:[#allocation2 + $0x18] sm:$0xff] %v545
    %552 = vst [vmem:[#allocation2 + $0x20] sm:$0xff] %v546
    %553 = vst [vmem:[#allocation2 + $0x28] sm:$0xff] %v547
    %v554 = vld [vmem:[%s522] sm:$0xff]
    %v555 = vld [vmem:[%s522 + $0x8] sm:$0xff]
    %v556 = vld [vmem:[%s522 + $0x10] sm:$0xff]
    %v557 = vld [vmem:[%s522 + $0x18] sm:$0xff]
    %562 = vrot.lane.b32.xlu0 %v554, 110
    %v563 = vpop.permute.xlu0 %562
    %564 = vrot.lane.b32.xlu0 %v555, 110
    %v565 = vpop.permute.xlu0 %564
    %566 = vrot.lane.b32.xlu0 %v556, 110
    %v567 = vpop.permute.xlu0 %566
    %568 = vrot.lane.b32.xlu0 %v557, 110
    %v569 = vpop.permute.xlu0 %568
    %v570 = vsel %vm83, %v563, %v565
    %v571 = vsel %vm83, %v565, %v567
    %v572 = vsel %vm83, %v567, %v569
    %576 = vst [vmem:[#allocation2 + $0x30] sm:$0xff] %v570
    %577 = vst [vmem:[#allocation2 + $0x38] sm:$0xff] %v571
    %578 = vst [vmem:[#allocation2 + $0x40] sm:$0xff] %v572
    %v579 = vld [vmem:[%s522] sm:$0xff]
    %v580 = vld [vmem:[%s522 + $0x8] sm:$0xff]
    %v581 = vld [vmem:[%s522 + $0x10] sm:$0xff]
    %v582 = vld [vmem:[%s522 + $0x18] sm:$0xff]
    %587 = vrot.lane.b32.xlu0 %v579, 109
    %v588 = vpop.permute.xlu0 %587
    %589 = vrot.lane.b32.xlu0 %v580, 109
    %v590 = vpop.permute.xlu0 %589
    %591 = vrot.lane.b32.xlu0 %v581, 109
    %v592 = vpop.permute.xlu0 %591
    %593 = vrot.lane.b32.xlu0 %v582, 109
    %v594 = vpop.permute.xlu0 %593
    %v595 = vsel %vm109, %v588, %v590
    %v596 = vsel %vm109, %v590, %v592
    %v597 = vsel %vm109, %v592, %v594
    %601 = vst [vmem:[#allocation2 + $0x48] sm:$0xff] %v595
    %602 = vst [vmem:[#allocation2 + $0x50] sm:$0xff] %v596
    %603 = vst [vmem:[#allocation2 + $0x58] sm:$0xff] %v597
    %v604 = vld [vmem:[%s1] sm:$0xff]
    %v605 = vld [vmem:[%s1 + $0x8] sm:$0xff]
    %v606 = vld [vmem:[%s1 + $0x10] sm:$0xff]
    %v607 = vld [vmem:[%s1 + $0x18] sm:$0xff]
    %v608 = vld [vmem:[#allocation2] sm:$0xff]
    %v609 = vld [vmem:[#allocation2 + $0x8] sm:$0xff]
    %v610 = vld [vmem:[#allocation2 + $0x10] sm:$0xff]
    %v611 = vld [vmem:[#allocation2 + $0x18] sm:$0xff]
    %v612 = vld [vmem:[#allocation2 + $0x20] sm:$0xff]
    %v613 = vld [vmem:[#allocation2 + $0x28] sm:$0xff]
    %v614 = vld [vmem:[#allocation2 + $0x30] sm:$0xff]
    %v615 = vld [vmem:[#allocation2 + $0x38] sm:$0xff]
    %v616 = vld [vmem:[#allocation2 + $0x40] sm:$0xff]
    %v617 = vld [vmem:[#allocation2 + $0x48] sm:$0xff]
    %v618 = vld [vmem:[#allocation2 + $0x50] sm:$0xff]
    %v619 = vld [vmem:[#allocation2 + $0x58] sm:$0xff]
    %v621 = vsel %vm135, %v604, 0
    %v624 = vsel %vm135, %v605, 0
    %v627 = vsel %vm135, %v606, 0
    %v630 = vsel %vm135, %v607, 0
    %632 = vmatprep.subr.mxu0 %v609
    %633 = vmatpush1.msra.mxu0 %v608
    %634 = vmatprep.subr.mxu0 %v612
    %635 = vmatpush1.msra.mxu0 %v611
    %636 = vmatprep.subr.mxu0 %v615
    %637 = vmatpush1.msra.mxu0 %v614
    %638 = vmatprep.subr.mxu0 %v618
    %639 = vmatpush1.msra.mxu0 %v617
    %640 = vmatprep.subr.mxu0 0.0
    %641 = vmatpush1.msra.mxu0 0.0
    %642 = vmatprep.subr.mxu0 0.0
    %643 = vmatpush1.msra.mxu0 0.0
    %644 = vmatprep.subr.mxu0 0.0
    %645 = vmatpush1.msra.mxu0 0.0
    %646 = vmatprep.subr.mxu0 0.0
    %647 = vmatpush1.msra.mxu0 0.0
    %648 = vmatprep.subr.mxu0 0.0
    %649 = vmatpush1.msra.mxu0 0.0
    %650 = vmatprep.subr.mxu0 0.0
    %651 = vmatpush1.msra.mxu0 0.0
    %652 = vmatprep.subr.mxu0 0.0
    %653 = vmatpush1.msra.mxu0 0.0
    %654 = vmatprep.subr.mxu0 0.0
    %655 = vmatpush1.msra.mxu0 0.0
    %656 = vmatprep.subr.mxu0 0.0
    %657 = vmatpush1.msra.mxu0 0.0
    %658 = vmatprep.subr.mxu0 0.0
    %659 = vmatpush1.msra.mxu0 0.0
    %660 = vmatprep.subr.mxu0 0.0
    %661 = vmatpush1.msra.mxu0 0.0
    %662 = vmatprep.subr.mxu0 0.0
    %663 = vmatpush1.msra.mxu0 0.0
    %664 = vmatprep.subr.mxu0 0.0
    %665 = vmatpush1.msra.mxu0 0.0
    %666 = vmatprep.subr.mxu0 0.0
    %667 = vmatpush1.msra.mxu0 0.0
    %668 = vmatprep.subr.mxu0 0.0
    %669 = vmatpush1.msra.mxu0 0.0
    %670 = vmatprep.subr.mxu0 0.0
    %671 = vmatpush1.msra.mxu0 0.0
    %672 = vmatprep.subr.mxu0 0.0
    %673 = vmatpush1.msra.mxu0 0.0
    %674 = vmatprep.subr.mxu0 0.0
    %675 = vmatpush1.msra.mxu0 0.0
    %676 = vmatprep.subr.mxu0 0.0
    %677 = vmatpush1.msra.mxu0 0.0
    %678 = vmatprep.subr.mxu0 0.0
    %679 = vmatpush1.msra.mxu0 0.0
    %680 = vmatprep.subr.mxu0 0.0
    %681 = vmatpush1.msra.mxu0 0.0
    %682 = vmatprep.subr.mxu0 0.0
    %683 = vmatpush1.msra.mxu0 0.0
    %684 = vmatprep.subr.mxu0 0.0
    %685 = vmatpush1.msra.mxu0 0.0
    %686 = vmatprep.subr.mxu0 0.0
    %687 = vmatpush1.msra.mxu0 0.0
    %688 = vmatprep.subr.mxu0 0.0
    %689 = vmatpush1.msra.mxu0 0.0
    %690 = vmatprep.subr.mxu0 0.0
    %691 = vmatpush1.msra.mxu0 0.0
    %692 = vmatprep.subr.mxu0 0.0
    %693 = vmatpush1.msra.mxu0 0.0
    %694 = vmatprep.subr.mxu0 0.0
    %695 = vmatpush1.msra.mxu0 0.0
    %696 = vmatprep.mubr.f32.mxu0 0.0
    %697 = vmatmul.mubr.f32.gmra.mrb[0].mxu0 %v621
    %v698 = vpop.f32.mrb[0].mxu0
    %v699 = vadd.f32 0.0, %v698
    %v700 = vpop.f32.mrb[0].mxu0
    %v701 = vadd.f32 0.0, %v700
    %702 = vmatprep.mubr.f32.mxu0 0.0
    %703 = vmatmul.mubr.f32.gmra.mrb[0].mxu0 %v624
    %v704 = vpop.f32.mrb[0].mxu0
    %v705 = vadd.f32 0.0, %v704
    %v706 = vpop.f32.mrb[0].mxu0
    %v707 = vadd.f32 0.0, %v706
    %708 = vmatprep.mubr.f32.mxu0 0.0
    %709 = vmatmul.mubr.f32.gmra.mrb[0].mxu0 %v627
    %v710 = vpop.f32.mrb[0].mxu0
    %v711 = vadd.f32 0.0, %v710
    %v712 = vpop.f32.mrb[0].mxu0
    %v713 = vadd.f32 0.0, %v712
    %714 = vmatprep.mubr.f32.mxu0 0.0
    %715 = vmatmul.mubr.f32.gmra.mrb[0].mxu0 %v630
    %v716 = vpop.f32.mrb[0].mxu0
    %v717 = vadd.f32 0.0, %v716
    %v718 = vpop.f32.mrb[0].mxu0
    %v719 = vadd.f32 0.0, %v718
    %720 = vdwg.mxu0
    %721 = vmatprep.subr.mxu0 0.0
    %722 = vmatpush1.msra.mxu0 %v610
    %723 = vmatprep.subr.mxu0 0.0
    %724 = vmatpush1.msra.mxu0 %v613
    %725 = vmatprep.subr.mxu0 0.0
    %726 = vmatpush1.msra.mxu0 %v616
    %727 = vmatprep.subr.mxu0 0.0
    %728 = vmatpush1.msra.mxu0 %v619
    %729 = vmatprep.subr.mxu0 0.0
    %730 = vmatpush1.msra.mxu0 0.0
    %731 = vmatprep.subr.mxu0 0.0
    %732 = vmatpush1.msra.mxu0 0.0
    %733 = vmatprep.subr.mxu0 0.0
    %734 = vmatpush1.msra.mxu0 0.0
    %735 = vmatprep.subr.mxu0 0.0
    %736 = vmatpush1.msra.mxu0 0.0
    %737 = vmatprep.subr.mxu0 0.0
    %738 = vmatpush1.msra.mxu0 0.0
    %739 = vmatprep.subr.mxu0 0.0
    %740 = vmatpush1.msra.mxu0 0.0
    %741 = vmatprep.subr.mxu0 0.0
    %742 = vmatpush1.msra.mxu0 0.0
    %743 = vmatprep.subr.mxu0 0.0
    %744 = vmatpush1.msra.mxu0 0.0
    %745 = vmatprep.subr.mxu0 0.0
    %746 = vmatpush1.msra.mxu0 0.0
    %747 = vmatprep.subr.mxu0 0.0
    %748 = vmatpush1.msra.mxu0 0.0
    %749 = vmatprep.subr.mxu0 0.0
    %750 = vmatpush1.msra.mxu0 0.0
    %751 = vmatprep.subr.mxu0 0.0
    %752 = vmatpush1.msra.mxu0 0.0
    %753 = vmatprep.subr.mxu0 0.0
    %754 = vmatpush1.msra.mxu0 0.0
    %755 = vmatprep.subr.mxu0 0.0
    %756 = vmatpush1.msra.mxu0 0.0
    %757 = vmatprep.subr.mxu0 0.0
    %758 = vmatpush1.msra.mxu0 0.0
    %759 = vmatprep.subr.mxu0 0.0
    %760 = vmatpush1.msra.mxu0 0.0
    %761 = vmatprep.subr.mxu0 0.0
    %762 = vmatpush1.msra.mxu0 0.0
    %763 = vmatprep.subr.mxu0 0.0
    %764 = vmatpush1.msra.mxu0 0.0
    %765 = vmatprep.subr.mxu0 0.0
    %766 = vmatpush1.msra.mxu0 0.0
    %767 = vmatprep.subr.mxu0 0.0
    %768 = vmatpush1.msra.mxu0 0.0
    %769 = vmatprep.subr.mxu0 0.0
    %770 = vmatpush1.msra.mxu0 0.0
    %771 = vmatprep.subr.mxu0 0.0
    %772 = vmatpush1.msra.mxu0 0.0
    %773 = vmatprep.subr.mxu0 0.0
    %774 = vmatpush1.msra.mxu0 0.0
    %775 = vmatprep.subr.mxu0 0.0
    %776 = vmatpush1.msra.mxu0 0.0
    %777 = vmatprep.subr.mxu0 0.0
    %778 = vmatpush1.msra.mxu0 0.0
    %779 = vmatprep.subr.mxu0 0.0
    %780 = vmatpush1.msra.mxu0 0.0
    %781 = vmatprep.subr.mxu0 0.0
    %782 = vmatpush1.msra.mxu0 0.0
    %783 = vmatprep.subr.mxu0 0.0
    %784 = vmatpush1.msra.mxu0 0.0
    %785 = vmatprep.mubr.f32.mxu0 0.0
    %786 = vmatmul.mubr.f32.gmra.mrb[0].mxu0 %v621
    %v787 = vpop.f32.mrb[0].mxu0
    %v788 = vadd.f32 0.0, %v787
    %v789 = vpop.f32.mrb[0].mxu0
    %790 = vmatprep.mubr.f32.mxu0 0.0
    %791 = vmatmul.mubr.f32.gmra.mrb[0].mxu0 %v624
    %v792 = vpop.f32.mrb[0].mxu0
    %v793 = vadd.f32 0.0, %v792
    %v794 = vpop.f32.mrb[0].mxu0
    %795 = vmatprep.mubr.f32.mxu0 0.0
    %796 = vmatmul.mubr.f32.gmra.mrb[0].mxu0 %v627
    %v797 = vpop.f32.mrb[0].mxu0
    %v798 = vadd.f32 0.0, %v797
    %v799 = vpop.f32.mrb[0].mxu0
    %800 = vmatprep.mubr.f32.mxu0 0.0
    %801 = vmatmul.mubr.f32.gmra.mrb[0].mxu0 %v630
    %v802 = vpop.f32.mrb[0].mxu0
    %v803 = vadd.f32 0.0, %v802
    %v804 = vpop.f32.mrb[0].mxu0
    %805 = vdwg.mxu0
    %v806 = vmul.f32 %v699, %v326
    %v807 = vmul.f32 %v701, %v330
    %v808 = vmul.f32 %v788, %v334
    %v809 = vadd.f32 %v806, %v807
    %v810 = vadd.f32 %v809, %v808
    %811 = vadd.xlane.f32.xlu0 %v810
    %v812 = vpop.xlane.xlu0 %811
    %v813 = vadd.f32 %v812, 0.0
    %v814 = vmul.f32 %v806, %v806
    %v815 = vmul.f32 %v807, %v807
    %v816 = vmul.f32 %v808, %v808
    %v817 = vadd.f32 %v814, %v815
    %v818 = vadd.f32 %v817, %v816
    %819 = vadd.xlane.f32.xlu0 %v818
    %v820 = vpop.xlane.xlu0 %819
    %v821 = vadd.f32 %v820, 0.0
    %v822 = vmul.f32 %v705, %v358
    %v823 = vmul.f32 %v707, %v362
    %v824 = vmul.f32 %v793, %v366
    %v825 = vadd.f32 %v822, %v823
    %v826 = vadd.f32 %v825, %v824
    %827 = vadd.xlane.f32.xlu0 %v826
    %v828 = vpop.xlane.xlu0 %827
    %v829 = vadd.f32 %v813, %v828
    %v830 = vmul.f32 %v822, %v822
    %v831 = vmul.f32 %v823, %v823
    %v832 = vmul.f32 %v824, %v824
    %v833 = vadd.f32 %v830, %v831
    %v834 = vadd.f32 %v833, %v832
    %835 = vadd.xlane.f32.xlu0 %v834
    %v836 = vpop.xlane.xlu0 %835
    %v837 = vadd.f32 %v821, %v836
    %v838 = vmul.f32 %v711, %v390
    %v839 = vmul.f32 %v713, %v394
    %v840 = vmul.f32 %v798, %v398
    %v841 = vadd.f32 %v838, %v839
    %v842 = vadd.f32 %v841, %v840
    %843 = vadd.xlane.f32.xlu0 %v842
    %v844 = vpop.xlane.xlu0 %843
    %v845 = vadd.f32 %v829, %v844
    %v846 = vmul.f32 %v838, %v838
    %v847 = vmul.f32 %v839, %v839
    %v848 = vmul.f32 %v840, %v840
    %v849 = vadd.f32 %v846, %v847
    %v850 = vadd.f32 %v849, %v848
    %851 = vadd.xlane.f32.xlu0 %v850
    %v852 = vpop.xlane.xlu0 %851
    %v853 = vadd.f32 %v837, %v852
    %v854 = vmul.f32 %v717, %v422
    %v855 = vmul.f32 %v719, %v426
    %v856 = vmul.f32 %v803, %v430
    %v857 = vadd.f32 %v854, %v855
    %v858 = vadd.f32 %v857, %v856
    %859 = vadd.xlane.f32.xlu0 %v858
    %v860 = vpop.xlane.xlu0 %859
    %v861 = vadd.f32 %v845, %v860
    %v862 = vmul.f32 %v854, %v854
    %v863 = vmul.f32 %v855, %v855
    %v864 = vmul.f32 %v856, %v856
    %v865 = vadd.f32 %v862, %v863
    %v866 = vadd.f32 %v865, %v864
    %867 = vadd.xlane.f32.xlu0 %v866
    %v868 = vpop.xlane.xlu0 %867
    %v869 = vadd.f32 %v853, %v868
    %v870 = vmul.f32 %v861, 0.0009765625
    %v871 = vmul.f32 %v869, 0.0009765625
    %v872 = vmul.f32 %v870, %v870
    %v873 = vsub.f32 %v871, %v872
    %v874 = vmax.f32 %v873, 0.0
    %v875 = vadd.f32 %v874, 1e-05
    %v876 = vrsqrt.pop %v875
    %v877 = vsub.f32 0.0, %v870
    %v878 = vmul.f32 %v877, %v876
    %v879 = vmul.f32 %v699, %v876
    %v880 = vmul.f32 %v701, %v876
    %v881 = vmul.f32 %v788, %v876
    %v882 = vadd.f32 %v879, %v878
    %v883 = vadd.f32 %v880, %v878
    %v884 = vadd.f32 %v881, %v878
    %v885 = vmul.f32 %v882, 0.2
    %v886 = vmul.f32 %v883, 0.2
    %v887 = vmul.f32 %v884, 0.2
    %v888 = vmax.f32 %v882, %v885
    %v889 = vmax.f32 %v883, %v886
    %v890 = vmax.f32 %v884, %v887
    %s891 = scalar_lea.vmem %s3, 96
    %892 = vst [vmem:[%s891] sm:$0xff] %v888
    %893 = vst [vmem:[%s891 + $0x8] sm:$0xff] %v889
    %894 = vst [vmem:[%s891 + $0x10] sm:$0xff] %v890
    %v895 = vmul.f32 %v705, %v876
    %v896 = vmul.f32 %v707, %v876
    %v897 = vmul.f32 %v793, %v876
    %v898 = vadd.f32 %v895, %v878
    %v899 = vadd.f32 %v896, %v878
    %v900 = vadd.f32 %v897, %v878
    %v901 = vmul.f32 %v898, 0.2
    %v902 = vmul.f32 %v899, 0.2
    %v903 = vmul.f32 %v900, 0.2
    %v904 = vmax.f32 %v898, %v901
    %v905 = vmax.f32 %v899, %v902
    %v906 = vmax.f32 %v900, %v903
    %s907 = scalar_lea.vmem %s3, 120
    %908 = vst [vmem:[%s907] sm:$0xff] %v904
    %909 = vst [vmem:[%s907 + $0x8] sm:$0xff] %v905
    %910 = vst [vmem:[%s907 + $0x10] sm:$0xff] %v906
    %v911 = vmul.f32 %v711, %v876
    %v912 = vmul.f32 %v713, %v876
    %v913 = vmul.f32 %v798, %v876
    %v914 = vadd.f32 %v911, %v878
    %v915 = vadd.f32 %v912, %v878
    %v916 = vadd.f32 %v913, %v878
    %v917 = vmul.f32 %v914, 0.2
    %v918 = vmul.f32 %v915, 0.2
    %v919 = vmul.f32 %v916, 0.2
    %v920 = vmax.f32 %v914, %v917
    %v921 = vmax.f32 %v915, %v918
    %v922 = vmax.f32 %v916, %v919
    %s923 = scalar_lea.vmem %s3, 144
    %924 = vst [vmem:[%s923] sm:$0xff] %v920
    %925 = vst [vmem:[%s923 + $0x8] sm:$0xff] %v921
    %926 = vst [vmem:[%s923 + $0x10] sm:$0xff] %v922
    %v927 = vmul.f32 %v717, %v876
    %v928 = vmul.f32 %v719, %v876
    %v929 = vmul.f32 %v803, %v876
    %v930 = vadd.f32 %v927, %v878
    %v931 = vadd.f32 %v928, %v878
    %v932 = vadd.f32 %v929, %v878
    %v933 = vmul.f32 %v930, 0.2
    %v934 = vmul.f32 %v931, 0.2
    %v935 = vmul.f32 %v932, 0.2
    %v936 = vmax.f32 %v930, %v933
    %v937 = vmax.f32 %v931, %v934
    %v938 = vmax.f32 %v932, %v935
    %s939 = scalar_lea.vmem %s3, 168
    %940 = vst [vmem:[%s939] sm:$0xff] %v936
    %941 = vst [vmem:[%s939 + $0x8] sm:$0xff] %v937
    %942 = vst [vmem:[%s939 + $0x10] sm:$0xff] %v938
    // Predicated region
    $region18: #{cnn_trans2d_layer.1} parent=1 // pred_check
      _
    $region19: #{cnn_trans2d_layer.1} parent=1 // pred_check_branch
      %944 = sbr.rel (0) target = $region21
    $region20: #{cnn_trans2d_layer.1} parent=1 // pred_region
      _
    $region21: #{cnn_trans2d_layer.1} parent=1 // pred_fallthru
      _
    // Predicated region
    $region22: #{cnn_trans2d_layer.1} parent=1 // pred_check
      _
    $region23: #{cnn_trans2d_layer.1} parent=1 // pred_check_branch
      %946 = sbr.rel (0) target = $region25
    $region24: #{cnn_trans2d_layer.1} parent=1 // pred_region
      _
    $region25: #{cnn_trans2d_layer.1} parent=1 // pred_fallthru
      _
    %947 = vsyncpa [#allocation4], 1

</llo_original>
